<compile_context>
chip_gen: v6e
topology: v6e:2x2x1
jax: 0.10.0
libtpu: 0.0.40
codegen_flags: <defaults>
</compile_context>

<pallas_src>
import functools

import jax
import jax.numpy as jnp
from jax.experimental import pallas as pl
from jax.experimental.pallas import tpu as pltpu

_NEG_BIG = -1e30  # class-dim padding value: softmax prob underflows to exactly 0 (finite f32)


def _round_up(x, m):
    return ((x + m - 1) // m) * m


def _vat_fused_kernel(*refs, has_mask, xi, epsilon, power_iterations):
    if has_mask:
        x_ref, d0_ref, ol_ref, w_ref, wt_ref, b_ref, mask_ref, kl_ref = refs
    else:
        x_ref, d0_ref, ol_ref, w_ref, wt_ref, b_ref, kl_ref = refs
        mask_ref = None

    # softmax / log-softmax of the (detached) original logits, f32, computed once.
    ol = ol_ref[...]
    ol_sh = ol - jnp.max(ol, axis=-1, keepdims=True)
    log_p = ol_sh - jnp.log(jnp.sum(jnp.exp(ol_sh), axis=-1, keepdims=True))
    p = jnp.exp(log_p)  # exp(log_softmax): no 0*log(0) hazard later.

    # Resident bf16 weights, hoisted once per tile (no per-iteration cast/transpose).
    w_bf = w_ref[...]    # (F, cpad)  bf16
    wt_bf = wt_ref[...]  # (cpad, F)  bf16, pre-transposed in the wrapper

    # Base (unperturbed) logits; linear model => model(x + d) = base + d @ W, hoisted.
    # bf16 operands + f32 accumulation (MXU-native; precision tradeoff per perf review).
    base = jnp.dot(x_ref[...], w_bf, preferred_element_type=jnp.float32) + b_ref[...]

    # Mask cast hoisted out of the loop (shipped as bf16 0/1 from HBM).
    mask_f = mask_ref[...].astype(jnp.float32) if has_mask else None

    def _prepare(d, scale):
        # torch _prepare_perturb: optional mask; divide by per-row SIGNED flat max + 1e-12
        # (exactly the reference's .max(dim=1)[0], NOT abs-max); then by L2 norm + 1e-6;
        # then multiply by scale.
        if mask_f is not None:
            d = d * mask_f
        mx = jnp.max(d, axis=1, keepdims=True) + 1e-12
        d1 = d / mx
        nrm = jnp.sqrt(jnp.sum(d1 * d1, axis=1, keepdims=True)) + 1e-6
        return d1 * (scale / nrm)

    d = d0_ref[...]  # exact Gaussian init from the wrapper (f32)
    # Static unroll: power_iterations is a small trace-time int (typically 1).
    for _ in range(power_iterations):
        d_hat = _prepare(d, xi)
        pert = base + jnp.dot(d_hat.astype(jnp.bfloat16), w_bf,
                              preferred_element_type=jnp.float32)
        z_sh = pert - jnp.max(pert, axis=-1, keepdims=True)
        e = jnp.exp(z_sh)
        q = e / jnp.sum(e, axis=-1, keepdims=True)
        # Analytic grad of mean_b KL(p_b || softmax(pert_b)) w.r.t. d for the linear model:
        # ((q - p)/B) @ W^T.  The uniform 1/B scale is dropped (next _prepare normalizes).
        # Padded classes contribute 0 (q == p == 0 there, and W^T pad rows are 0).
        g = q - p
        d = jnp.dot(g.astype(jnp.bfloat16), wt_bf, preferred_element_type=jnp.float32)

    # Final adversarial perturbation + KL.
    r_vadv = _prepare(d, epsilon)
    pert = base + jnp.dot(r_vadv.astype(jnp.bfloat16), w_bf,
                          preferred_element_type=jnp.float32)
    z_sh = pert - jnp.max(pert, axis=-1, keepdims=True)
    log_q = z_sh - jnp.log(jnp.sum(jnp.exp(z_sh), axis=-1, keepdims=True))
    kl = jnp.sum(p * (log_p - log_q), axis=-1, keepdims=True)   # (tb, 1)
    kl_ref[...] = jnp.broadcast_to(kl, kl_ref.shape)            # lane-dense store


def _unsqueeze_to(source, target_ndim):
    return source.reshape(source.shape + (1,) * (target_ndim - source.ndim))


def _vmem_bytes(tb, feat, cpad, has_mask):
    """Per-grid-step VMEM estimate: double-buffered HBM blocks + in-kernel f32 temporaries."""
    dbuf = 2
    n = dbuf * tb * feat * 2           # x (bf16)
    n += dbuf * tb * feat * 4          # d0 (f32)
    if has_mask:
        n += dbuf * tb * feat * 2 + tb * feat * 4   # mask blocks (bf16) + hoisted f32 copy
    n += dbuf * tb * cpad * 4          # original logits (f32)
    n += dbuf * tb * 128 * 4           # kl output (f32)
    n += dbuf * feat * cpad * 2 * 2    # W and W^T (bf16, constant index_map -> resident)
    n += dbuf * cpad * 4               # bias
    n += 6 * tb * feat * 4             # f32 temporaries (d, d_hat, d1, grad, slack)
    return n


def _pick_tb(batch, feat, cpad, has_mask, budget_bytes):
    # Cap 256 plays to the 256-wide v6e/v7x MXU; the VMEM budget check shrinks it for
    # large F (and for v5e/v7x-sized budgets).  Guarantee >= 2 batch tiles when B permits
    # so the "parallel" grid axis can feed both v7x TensorCores.
    cap = 256
    if batch > 8:
        cap = min(cap, _round_up(-(-batch // 2), 8))
    tb = max(8, min(cap, _round_up(batch, 8)))
    while tb > 8 and _vmem_bytes(tb, feat, cpad, has_mask) > budget_bytes:
        tb -= 8
    # NOTE: F is kept whole per tile (the per-row max/L2 normalization needs a full-F
    # reduction).  For F large enough that even tb=8 blows the budget, a two-pass F split
    # would be needed.
    return tb


def vat_loss_forward(original_logits, model_input, W, b, key, *,
                     epsilon, xi, power_iterations, model_input_mask=None):
    """VatLoss.forward for the built-in linear classifier; returns per-example KL, shape (B,)."""
    B = model_input.shape[0]
    x_flat = model_input.reshape(B, -1)
    F = x_flat.shape[1]
    C = W.shape[1]
    has_mask = model_input_mask is not None

    cpad = _round_up(max(C, 128), 128)

    VMEM_BUDGET = 40 * 1024 * 1024   # fits v7x's 64 MiB with headroom; v5e/v6e have 128 MiB
    tb = _pick_tb(B, F, cpad, has_mask, VMEM_BUDGET)
    bpad = _round_up(B, tb)
    num_tiles = bpad // tb

    # bf16 MXU-native operands for x / W / W^T; logits, bias and the softmax/KL math stay
    # f32 (the -1e30 class padding must stay finite-f32 so probabilities underflow to 0).
    x_pad = jnp.zeros((bpad, F), jnp.bfloat16).at[:B].set(x_flat.astype(jnp.bfloat16))
    w_bf = jnp.asarray(W, jnp.float32).astype(jnp.bfloat16)
    w_pad = jnp.zeros((F, cpad), jnp.bfloat16).at[:, :C].set(w_bf)
    wt_pad = jnp.zeros((cpad, F), jnp.bfloat16).at[:C, :].set(w_bf.T)   # pre-transposed
    b_pad = jnp.full((1, cpad), _NEG_BIG, jnp.float32).at[0, :C].set(
        jnp.asarray(b, jnp.float32).reshape(-1))
    ol_pad = jnp.full((bpad, cpad), _NEG_BIG, jnp.float32).at[:B, :C].set(
        original_logits.astype(jnp.float32))

    # Exact-Gaussian power-iteration init (torch.randn_like equivalent), drawn in the
    # wrapper: no in-kernel TPU PRNG (which also has no CPU/interpret lowering).
    d0 = jax.random.normal(key, (B, F), dtype=jnp.float32)
    d0_pad = jnp.zeros((bpad, F), jnp.float32).at[:B].set(d0)

    args = [x_pad, d0_pad, ol_pad, w_pad, wt_pad, b_pad]
    in_specs = [
        pl.BlockSpec((tb, F), lambda i: (i, 0)),      # x (bf16)
        pl.BlockSpec((tb, F), lambda i: (i, 0)),      # d0 (f32)
        pl.BlockSpec((tb, cpad), lambda i: (i, 0)),   # original logits (f32)
        pl.BlockSpec((F, cpad), lambda i: (0, 0)),    # W   (bf16; constant index -> resident)
        pl.BlockSpec((cpad, F), lambda i: (0, 0)),    # W^T (bf16; constant index -> resident)
        pl.BlockSpec((1, cpad), lambda i: (0, 0)),    # bias (f32; resident)
    ]
    if has_mask:
        m = jnp.asarray(model_input_mask, jnp.float32)
        m = _unsqueeze_to(m, model_input.ndim)
        m = jnp.broadcast_to(m, model_input.shape).reshape(B, -1)
        # 0/1 mask is lossless in bf16; halves its HBM stream and VMEM block.
        m_pad = jnp.ones((bpad, F), jnp.bfloat16).at[:B].set(m.astype(jnp.bfloat16))
        args.append(m_pad)
        in_specs.append(pl.BlockSpec((tb, F), lambda i: (i, 0)))

    pi = int(power_iterations)
    flops = 2 * bpad * F * cpad * (2 + 2 * pi)
    transcendentals = bpad * cpad * (2 * pi + 4)
    # W / W^T / bias counted ONCE: constant index_map -> Pallas keeps the block resident.
    bytes_accessed = (2 * bpad * F + 4 * bpad * F + (2 * bpad * F if has_mask else 0)
                      + 4 * bpad * cpad + 2 * (2 * F * cpad) + 4 * cpad + 4 * bpad * 128)

    kernel = functools.partial(
        _vat_fused_kernel, has_mask=has_mask, xi=float(xi), epsilon=float(epsilon),
        power_iterations=pi)

    out = pl.pallas_call(
        kernel,
        out_shape=jax.ShapeDtypeStruct((bpad, 128), jnp.float32),
        grid=(num_tiles,),
        in_specs=in_specs,
        out_specs=pl.BlockSpec((tb, 128), lambda i: (i, 0)),
        compiler_params=pltpu.CompilerParams(
            dimension_semantics=("parallel",),       # batch tiles independent -> megacore
            vmem_limit_bytes=48 * 1024 * 1024),
        cost_estimate=pl.CostEstimate(
            flops=flops, transcendentals=transcendentals, bytes_accessed=bytes_accessed),
    )(*args)
    return out[:B, 0]


if __name__ == "__main__":
    key = jax.random.PRNGKey(0)
    k_x, k_w, k_d = jax.random.split(key, 3)

    B, C, H, Wsp = 2, 4, 16, 16
    num_classes = 8
    F = C * H * Wsp

    x = jax.random.normal(k_x, (B, C, H, Wsp), dtype=jnp.float32)
    W = jax.random.normal(k_w, (F, num_classes), dtype=jnp.float32) * 0.05
    b = jnp.zeros((num_classes,), dtype=jnp.float32)

    # External model_forward output on the clean input (an argument of VatLoss.forward).
    original_logits = x.reshape(B, -1) @ W + b

    epsilon, xi, power_iterations = 1.0, 1e-6, 1

    kl = vat_loss_forward(original_logits, x, W, b, k_d,
                          epsilon=epsilon, xi=xi, power_iterations=power_iterations)
    kl = jax.block_until_ready(kl)
    assert kl.shape == (B,)
    assert bool(jnp.all(jnp.isfinite(kl)))

    # Exercise the mask path: an all-ones mask must reproduce the unmasked result.
    kl_masked = vat_loss_forward(
        original_logits, x, W, b, k_d, epsilon=epsilon, xi=xi,
        power_iterations=power_iterations,
        model_input_mask=jnp.ones((B,), dtype=jnp.float32))
    kl_masked = jax.block_until_ready(kl_masked)
    assert bool(jnp.allclose(kl, kl_masked, rtol=1e-3, atol=1e-5))

    print("KERNEL_OK")
</pallas_src>

<mosaic_0001>
module attributes {stable_mosaic.version = 11 : i64} {
  func.func @_vat_fused_kernel(%arg0: i32, %arg1: memref<8x1024xbf16, #tpu.memory_space<vmem>>, %arg2: memref<8x1024xf32, #tpu.memory_space<vmem>>, %arg3: memref<8x128xf32, #tpu.memory_space<vmem>>, %arg4: memref<1024x128xbf16, #tpu.memory_space<vmem>>, %arg5: memref<128x1024xbf16, #tpu.memory_space<vmem>>, %arg6: memref<1x128xf32, #tpu.memory_space<vmem>>, %arg7: memref<8x128xf32, #tpu.memory_space<vmem>>) attributes {dimension_semantics = [#tpu.dimension_semantics<parallel>], iteration_bounds = array<i64: 1>, scalar_prefetch = 0 : i64, scratch_operands = 0 : i64, tpu.core_type = #tpu.core_type<tc>, window_params = [{transform_indices = @transform_0, window_bounds = array<i64: 8, 1024>}, {transform_indices = @transform_1, window_bounds = array<i64: 8, 1024>}, {transform_indices = @transform_2, window_bounds = array<i64: 8, 128>}, {pipeline_mode = #tpu.pipeline_mode<synchronous>, transform_indices = @transform_3, window_bounds = array<i64: 1024, 128>}, {pipeline_mode = #tpu.pipeline_mode<synchronous>, transform_indices = @transform_4, window_bounds = array<i64: 128, 1024>}, {pipeline_mode = #tpu.pipeline_mode<synchronous>, transform_indices = @transform_5, window_bounds = array<i64: 1, 128>}, {transform_indices = @transform_6, window_bounds = array<i64: 8, 128>}]} {
    %c0 = arith.constant 0 : index
    %c0_0 = arith.constant 0 : index
    %0 = vector.load %arg3[%c0, %c0_0] : memref<8x128xf32, #tpu.memory_space<vmem>>, vector<8x128xf32>
    %cst = arith.constant dense<0xFF800000> : vector<8xf32>
    %1 = vector.multi_reduction <maximumf>, %0, %cst [1] : vector<8x128xf32> to vector<8xf32>
    %2 = vector.shape_cast %1 : vector<8xf32> to vector<8x1xf32>
    %3 = vector.broadcast %2 : vector<8x1xf32> to vector<8x128xf32>
    %4 = arith.subf %0, %3 : vector<8x128xf32>
    %5 = math.exp %4 : vector<8x128xf32>
    %cst_1 = arith.constant dense<0.000000e+00> : vector<8xf32>
    %6 = vector.multi_reduction <add>, %5, %cst_1 [1] : vector<8x128xf32> to vector<8xf32>
    %7 = vector.shape_cast %6 : vector<8xf32> to vector<8x1xf32>
    %8 = math.log %7 : vector<8x1xf32>
    %9 = vector.broadcast %8 : vector<8x1xf32> to vector<8x128xf32>
    %10 = arith.subf %4, %9 : vector<8x128xf32>
    %11 = math.exp %10 : vector<8x128xf32>
    %c0_2 = arith.constant 0 : index
    %c0_3 = arith.constant 0 : index
    %12 = vector.load %arg4[%c0_2, %c0_3] : memref<1024x128xbf16, #tpu.memory_space<vmem>>, vector<1024x128xbf16>
    %c0_4 = arith.constant 0 : index
    %c0_5 = arith.constant 0 : index
    %13 = vector.load %arg5[%c0_4, %c0_5] : memref<128x1024xbf16, #tpu.memory_space<vmem>>, vector<128x1024xbf16>
    %c0_6 = arith.constant 0 : index
    %c0_7 = arith.constant 0 : index
    %14 = vector.load %arg1[%c0_6, %c0_7] : memref<8x1024xbf16, #tpu.memory_space<vmem>>, vector<8x1024xbf16>
    %cst_8 = arith.constant dense<0.000000e+00> : vector<8x128xf32>
    %15 = tpu.matmul %14, %12, %cst_8 {dimension_numbers = #tpu.dot_dimension_numbers<[1], [0], [0], [1], [0, 0, 1, 1], [], []>} : vector<8x1024xbf16>, vector<1024x128xbf16>, vector<8x128xf32> -> vector<8x128xf32>
    %c0_9 = arith.constant 0 : index
    %c0_10 = arith.constant 0 : index
    %16 = vector.load %arg6[%c0_9, %c0_10] : memref<1x128xf32, #tpu.memory_space<vmem>>, vector<1x128xf32>
    %17 = vector.broadcast %16 : vector<1x128xf32> to vector<8x128xf32>
    %18 = arith.addf %15, %17 : vector<8x128xf32>
    %c0_11 = arith.constant 0 : index
    %c0_12 = arith.constant 0 : index
    %19 = vector.load %arg2[%c0_11, %c0_12] : memref<8x1024xf32, #tpu.memory_space<vmem>>, vector<8x1024xf32>
    %cst_13 = arith.constant dense<0xFF800000> : vector<8xf32>
    %20 = vector.multi_reduction <maximumf>, %19, %cst_13 [1] : vector<8x1024xf32> to vector<8xf32>
    %21 = vector.shape_cast %20 : vector<8xf32> to vector<8x1xf32>
    %cst_14 = arith.constant 9.99999996E-13 : f32
    %22 = vector.broadcast %cst_14 : f32 to vector<8x1xf32>
    %23 = arith.addf %21, %22 : vector<8x1xf32>
    %24 = vector.broadcast %23 : vector<8x1xf32> to vector<8x1024xf32>
    %25 = arith.divf %19, %24 : vector<8x1024xf32>
    %26 = arith.mulf %25, %25 : vector<8x1024xf32>
    %cst_15 = arith.constant dense<0.000000e+00> : vector<8xf32>
    %27 = vector.multi_reduction <add>, %26, %cst_15 [1] : vector<8x1024xf32> to vector<8xf32>
    %28 = vector.shape_cast %27 : vector<8xf32> to vector<8x1xf32>
    %29 = math.sqrt %28 : vector<8x1xf32>
    %cst_16 = arith.constant 9.99999997E-7 : f32
    %30 = vector.broadcast %cst_16 : f32 to vector<8x1xf32>
    %31 = arith.addf %29, %30 : vector<8x1xf32>
    %cst_17 = arith.constant 9.99999997E-7 : f32
    %32 = vector.broadcast %cst_17 : f32 to vector<8x1xf32>
    %33 = arith.divf %32, %31 : vector<8x1xf32>
    %34 = vector.broadcast %33 : vector<8x1xf32> to vector<8x1024xf32>
    %35 = arith.mulf %25, %34 : vector<8x1024xf32>
    %36 = arith.truncf %35 : vector<8x1024xf32> to vector<8x1024xbf16>
    %cst_18 = arith.constant dense<0.000000e+00> : vector<8x128xf32>
    %37 = tpu.matmul %36, %12, %cst_18 {dimension_numbers = #tpu.dot_dimension_numbers<[1], [0], [0], [1], [0, 0, 1, 1], [], []>} : vector<8x1024xbf16>, vector<1024x128xbf16>, vector<8x128xf32> -> vector<8x128xf32>
    %38 = arith.addf %18, %37 : vector<8x128xf32>
    %cst_19 = arith.constant dense<0xFF800000> : vector<8xf32>
    %39 = vector.multi_reduction <maximumf>, %38, %cst_19 [1] : vector<8x128xf32> to vector<8xf32>
    %40 = vector.shape_cast %39 : vector<8xf32> to vector<8x1xf32>
    %41 = vector.broadcast %40 : vector<8x1xf32> to vector<8x128xf32>
    %42 = arith.subf %38, %41 : vector<8x128xf32>
    %43 = math.exp %42 : vector<8x128xf32>
    %cst_20 = arith.constant dense<0.000000e+00> : vector<8xf32>
    %44 = vector.multi_reduction <add>, %43, %cst_20 [1] : vector<8x128xf32> to vector<8xf32>
    %45 = vector.shape_cast %44 : vector<8xf32> to vector<8x1xf32>
    %46 = vector.broadcast %45 : vector<8x1xf32> to vector<8x128xf32>
    %47 = arith.divf %43, %46 : vector<8x128xf32>
    %48 = arith.subf %47, %11 : vector<8x128xf32>
    %49 = arith.truncf %48 : vector<8x128xf32> to vector<8x128xbf16>
    %cst_21 = arith.constant dense<0.000000e+00> : vector<8x1024xf32>
    %50 = tpu.matmul %49, %13, %cst_21 {dimension_numbers = #tpu.dot_dimension_numbers<[1], [0], [0], [1], [0, 0, 1, 1], [], []>} : vector<8x128xbf16>, vector<128x1024xbf16>, vector<8x1024xf32> -> vector<8x1024xf32>
    %cst_22 = arith.constant dense<0xFF800000> : vector<8xf32>
    %51 = vector.multi_reduction <maximumf>, %50, %cst_22 [1] : vector<8x1024xf32> to vector<8xf32>
    %52 = vector.shape_cast %51 : vector<8xf32> to vector<8x1xf32>
    %cst_23 = arith.constant 9.99999996E-13 : f32
    %53 = vector.broadcast %cst_23 : f32 to vector<8x1xf32>
    %54 = arith.addf %52, %53 : vector<8x1xf32>
    %55 = vector.broadcast %54 : vector<8x1xf32> to vector<8x1024xf32>
    %56 = arith.divf %50, %55 : vector<8x1024xf32>
    %57 = arith.mulf %56, %56 : vector<8x1024xf32>
    %cst_24 = arith.constant dense<0.000000e+00> : vector<8xf32>
    %58 = vector.multi_reduction <add>, %57, %cst_24 [1] : vector<8x1024xf32> to vector<8xf32>
    %59 = vector.shape_cast %58 : vector<8xf32> to vector<8x1xf32>
    %60 = math.sqrt %59 : vector<8x1xf32>
    %cst_25 = arith.constant 9.99999997E-7 : f32
    %61 = vector.broadcast %cst_25 : f32 to vector<8x1xf32>
    %62 = arith.addf %60, %61 : vector<8x1xf32>
    %cst_26 = arith.constant 1.000000e+00 : f32
    %63 = vector.broadcast %cst_26 : f32 to vector<8x1xf32>
    %64 = arith.divf %63, %62 : vector<8x1xf32>
    %65 = vector.broadcast %64 : vector<8x1xf32> to vector<8x1024xf32>
    %66 = arith.mulf %56, %65 : vector<8x1024xf32>
    %67 = arith.truncf %66 : vector<8x1024xf32> to vector<8x1024xbf16>
    %cst_27 = arith.constant dense<0.000000e+00> : vector<8x128xf32>
    %68 = tpu.matmul %67, %12, %cst_27 {dimension_numbers = #tpu.dot_dimension_numbers<[1], [0], [0], [1], [0, 0, 1, 1], [], []>} : vector<8x1024xbf16>, vector<1024x128xbf16>, vector<8x128xf32> -> vector<8x128xf32>
    %69 = arith.addf %18, %68 : vector<8x128xf32>
    %cst_28 = arith.constant dense<0xFF800000> : vector<8xf32>
    %70 = vector.multi_reduction <maximumf>, %69, %cst_28 [1] : vector<8x128xf32> to vector<8xf32>
    %71 = vector.shape_cast %70 : vector<8xf32> to vector<8x1xf32>
    %72 = vector.broadcast %71 : vector<8x1xf32> to vector<8x128xf32>
    %73 = arith.subf %69, %72 : vector<8x128xf32>
    %74 = math.exp %73 : vector<8x128xf32>
    %cst_29 = arith.constant dense<0.000000e+00> : vector<8xf32>
    %75 = vector.multi_reduction <add>, %74, %cst_29 [1] : vector<8x128xf32> to vector<8xf32>
    %76 = vector.shape_cast %75 : vector<8xf32> to vector<8x1xf32>
    %77 = math.log %76 : vector<8x1xf32>
    %78 = vector.broadcast %77 : vector<8x1xf32> to vector<8x128xf32>
    %79 = arith.subf %73, %78 : vector<8x128xf32>
    %80 = arith.subf %10, %79 : vector<8x128xf32>
    %81 = arith.mulf %11, %80 : vector<8x128xf32>
    %cst_30 = arith.constant dense<0.000000e+00> : vector<8xf32>
    %82 = vector.multi_reduction <add>, %81, %cst_30 [1] : vector<8x128xf32> to vector<8xf32>
    %83 = vector.shape_cast %82 : vector<8xf32> to vector<8x1xf32>
    %84 = vector.shape_cast %83 : vector<8x1xf32> to vector<8x1xf32>
    %85 = vector.broadcast %84 : vector<8x1xf32> to vector<8x128xf32>
    %c0_31 = arith.constant 0 : index
    %c0_32 = arith.constant 0 : index
    %86 = vector.load %arg7[%c0_31, %c0_32] : memref<8x128xf32, #tpu.memory_space<vmem>>, vector<8x128xf32>
    tpu.vector_store %arg7[%c0_31, %c0_32], %85 {strides = array<i32>} : memref<8x128xf32, #tpu.memory_space<vmem>>, vector<8x128xf32>,
    return
  }
  func.func @transform_0(%arg0: i32) -> (i32, i32) {
    %c0_i32 = arith.constant 0 : i32
    %c0_i32_0 = arith.constant 0 : i32
    return %arg0, %c0_i32 : i32, i32
  }
  func.func @transform_1(%arg0: i32) -> (i32, i32) {
    %c0_i32 = arith.constant 0 : i32
    %c0_i32_0 = arith.constant 0 : i32
    return %arg0, %c0_i32 : i32, i32
  }
  func.func @transform_2(%arg0: i32) -> (i32, i32) {
    %c0_i32 = arith.constant 0 : i32
    %c0_i32_0 = arith.constant 0 : i32
    return %arg0, %c0_i32 : i32, i32
  }
  func.func @transform_3(%arg0: i32) -> (i32, i32) {
    %c0_i32 = arith.constant 0 : i32
    %c0_i32_0 = arith.constant 0 : i32
    %c0_i32_1 = arith.constant 0 : i32
    return %c0_i32, %c0_i32_0 : i32, i32
  }
  func.func @transform_4(%arg0: i32) -> (i32, i32) {
    %c0_i32 = arith.constant 0 : i32
    %c0_i32_0 = arith.constant 0 : i32
    %c0_i32_1 = arith.constant 0 : i32
    return %c0_i32, %c0_i32_0 : i32, i32
  }
  func.func @transform_5(%arg0: i32) -> (i32, i32) {
    %c0_i32 = arith.constant 0 : i32
    %c0_i32_0 = arith.constant 0 : i32
    %c0_i32_1 = arith.constant 0 : i32
    return %c0_i32, %c0_i32_0 : i32, i32
  }
  func.func @transform_6(%arg0: i32) -> (i32, i32) {
    %c0_i32 = arith.constant 0 : i32
    %c0_i32_0 = arith.constant 0 : i32
    return %arg0, %c0_i32 : i32, i32
  }
}

</mosaic_0001>

<llo_original>
// kernel: tpu_custom_call.1
$region0: #{tpu_custom_call.1}
  #allocation0 [shape = 'u32[]', space=smem, size = 0x4, offset = 0x4, fixed_abs, tag = 'smem constant byte address 0x4 - core index']
  #allocation1 [shape = 'u32[144,128]{1,0:T(1,128)}', space=vmem, size = 0x12000, scoped, tag = 'internal scratch']
  %s0 = inlined_call_operand.hbm [shape: bf16[8,1024], index: 0, kind: input, shape index: {}]
  %s1 = inlined_call_operand.hbm [shape: f32[8,1024], index: 1, kind: input, shape index: {}]
  %s2 = inlined_call_operand.hbm [shape: f32[8,128], index: 2, kind: input, shape index: {}]
  %s3 = inlined_call_operand.hbm [shape: bf16[1024,128], index: 3, kind: input, shape index: {}]
  %s4 = inlined_call_operand.hbm [shape: bf16[128,1024], index: 4, kind: input, shape index: {}]
  %s5 = inlined_call_operand.vmem [shape: f32[1,128], index: 5, kind: input, shape index: {}]
  %s6 = inlined_call_operand.hbm [shape: f32[8,128], index: 6, kind: output, shape index: {}]
  %s7 = sld [smem:[#allocation0]]
  $region54: #{tpu_custom_call.1} parent=0
    _
  %s9 = ssub.s32 1, %s7
  %s10 = scalar_select 0, %s9, %s7
  $region1: #{tpu_custom_call.1} parent=0
    #allocation2 [shape = 'u8[16384]{0}', space=vmem, size = 0x4000, scoped, tag = 'input window, operand 0, single buffered']
    #allocation3 [shape = 's32[1]{0}', space=sflag, size = 0x4, scoped, tag = 'scoped memory for tpu_custom_call.1']
    #allocation4 [shape = 's32[1]{0}', space=sflag, size = 0x4, scoped, tag = 'scoped memory for tpu_custom_call.1']
    #allocation5 [shape = 'u8[32768]{0}', space=vmem, size = 0x8000, scoped, tag = 'input window, operand 1, single buffered']
    #allocation6 [shape = 's32[1]{0}', space=sflag, size = 0x4, scoped, tag = 'scoped memory for tpu_custom_call.1']
    #allocation7 [shape = 'u8[4096]{0}', space=vmem, size = 0x1000, scoped, tag = 'input window, operand 2, single buffered']
    #allocation8 [shape = 'u8[262144]{0}', space=vmem, size = 0x40000, scoped, tag = 'input window, operand 3, single buffered']
    #allocation9 [shape = 's32[1]{0}', space=sflag, size = 0x4, scoped, tag = 'scoped memory for tpu_custom_call.1']
    #allocation10 [shape = 'u8[262144]{0}', space=vmem, size = 0x40000, scoped, tag = 'input window, operand 4, single buffered']
    #allocation11 [shape = 'u8[4096]{0}', space=vmem, size = 0x1000, scoped, tag = 'output window, operand 0, single buffered']
    %11 = vsyncpa [#allocation3], 0
    %12 = vsyncpa [#allocation6], 0
    %13 = vsyncpa [#allocation9], 0
    %14 = vsyncpa [#allocation4], 0
    // Predicated region
    $region2: #{tpu_custom_call.1} parent=1 // pred_check
      _
    $region3: #{tpu_custom_call.1} parent=1 // pred_check_branch
      %16 = sbr.rel (0) target = $region5
    $region4: #{tpu_custom_call.1} parent=1 // pred_region
      %s18 = ssub.s32 512, 512
      %19 = vsyncadd [#allocation3], %s18
      %s21 = sshll.u32 [#allocation2], 4
      %s22 = int_to_ptr.vmem [resolvable:$true] %s21
      %24 = dma.hbm_to_vmem [thread:$0]  %s0, 512, %s22, [#allocation3]
    $region5: #{tpu_custom_call.1} parent=1 // pred_fallthru
      _
    // Predicated region
    $region6: #{tpu_custom_call.1} parent=1 // pred_check
      _
    $region7: #{tpu_custom_call.1} parent=1 // pred_check_branch
      %26 = sbr.rel (0) target = $region9
    $region8: #{tpu_custom_call.1} parent=1 // pred_region
      %s28 = ssub.s32 1024, 1024
      %29 = vsyncadd [#allocation6], %s28
      %s31 = sshll.u32 [#allocation5], 4
      %s32 = int_to_ptr.vmem [resolvable:$true] %s31
      %34 = dma.hbm_to_vmem [thread:$0]  %s1, 1024, %s32, [#allocation6]
    $region9: #{tpu_custom_call.1} parent=1 // pred_fallthru
      _
    // Predicated region
    $region10: #{tpu_custom_call.1} parent=1 // pred_check
      _
    $region11: #{tpu_custom_call.1} parent=1 // pred_check_branch
      %36 = sbr.rel (0) target = $region13
    $region12: #{tpu_custom_call.1} parent=1 // pred_region
      %s38 = ssub.s32 128, 128
      %39 = vsyncadd [#allocation6], %s38
      %s41 = sshll.u32 [#allocation7], 4
      %s42 = int_to_ptr.vmem [resolvable:$true] %s41
      %44 = dma.hbm_to_vmem [thread:$0]  %s2, 128, %s42, [#allocation6]
    $region13: #{tpu_custom_call.1} parent=1 // pred_fallthru
      _
    // Predicated region
    $region14: #{tpu_custom_call.1} parent=1 // pred_check
      _
    $region15: #{tpu_custom_call.1} parent=1 // pred_check_branch
      %46 = sbr.rel (0) target = $region17
    $region16: #{tpu_custom_call.1} parent=1 // pred_region
      %s48 = ssub.s32 8192, 8192
      %49 = vsyncadd [#allocation9], %s48
      %s50 = sshll.u32 [#allocation8], 4
      %s51 = int_to_ptr.vmem [resolvable:$true] %s50
      %56 = dma.hbm_to_vmem [thread:$0]  %s3, 8192, %s51, [#allocation9], 64, 64, 4
    $region17: #{tpu_custom_call.1} parent=1 // pred_fallthru
      _
    // Predicated region
    $region18: #{tpu_custom_call.1} parent=1 // pred_check
      _
    $region19: #{tpu_custom_call.1} parent=1 // pred_check_branch
      %58 = sbr.rel (0) target = $region21
    $region20: #{tpu_custom_call.1} parent=1 // pred_region
      %s60 = ssub.s32 8192, 8192
      %61 = vsyncadd [#allocation9], %s60
      %s62 = sshll.u32 [#allocation10], 4
      %s63 = int_to_ptr.vmem [resolvable:$true] %s62
      %68 = dma.hbm_to_vmem [thread:$0]  %s4, 8192, %s63, [#allocation9], 512, 512, 32
    $region21: #{tpu_custom_call.1} parent=1 // pred_fallthru
      _
    // Predicated region
    $region22: #{tpu_custom_call.1} parent=1 // pred_check
      _
    $region23: #{tpu_custom_call.1} parent=1 // pred_check_branch
      %70 = sbr.rel (0) target = $region25
    $region24: #{tpu_custom_call.1} parent=1 // pred_region
      _
    $region25: #{tpu_custom_call.1} parent=1 // pred_fallthru
      _
    // Predicated region
    $region26: #{tpu_custom_call.1} parent=1 // pred_check
      _
    $region27: #{tpu_custom_call.1} parent=1 // pred_check_branch
      %72 = sbr.rel (0) target = $region29
    $region28: #{tpu_custom_call.1} parent=1 // pred_region
      %73 = dma.done [#allocation3], 512
    $region29: #{tpu_custom_call.1} parent=1 // pred_fallthru
      _
    // Predicated region
    $region30: #{tpu_custom_call.1} parent=1 // pred_check
      _
    $region31: #{tpu_custom_call.1} parent=1 // pred_check_branch
      %75 = sbr.rel (0) target = $region33
    $region32: #{tpu_custom_call.1} parent=1 // pred_region
      %76 = dma.done [#allocation6], 1024
    $region33: #{tpu_custom_call.1} parent=1 // pred_fallthru
      _
    // Predicated region
    $region34: #{tpu_custom_call.1} parent=1 // pred_check
      _
    $region35: #{tpu_custom_call.1} parent=1 // pred_check_branch
      %78 = sbr.rel (0) target = $region37
    $region36: #{tpu_custom_call.1} parent=1 // pred_region
      %79 = dma.done [#allocation6], 128
    $region37: #{tpu_custom_call.1} parent=1 // pred_fallthru
      _
    // Predicated region
    $region38: #{tpu_custom_call.1} parent=1 // pred_check
      _
    $region39: #{tpu_custom_call.1} parent=1 // pred_check_branch
      %81 = sbr.rel (0) target = $region41
    $region40: #{tpu_custom_call.1} parent=1 // pred_region
      %82 = dma.done [#allocation9], 8192
    $region41: #{tpu_custom_call.1} parent=1 // pred_fallthru
      _
    // Predicated region
    $region42: #{tpu_custom_call.1} parent=1 // pred_check
      _
    $region43: #{tpu_custom_call.1} parent=1 // pred_check_branch
      %84 = sbr.rel (0) target = $region45
    $region44: #{tpu_custom_call.1} parent=1 // pred_region
      %85 = dma.done [#allocation9], 8192
    $region45: #{tpu_custom_call.1} parent=1 // pred_fallthru
      _
    %v87 = vld [vmem:[#allocation7] sm:$0xff]
    %88 = vmax.xlane.f32.xlu0 %v87
    %v89 = vpop.xlane.xlu0 %88
    %v90 = vsub.f32 %v87, %v89
    %v91 = vmul.f32 %v90, 1.442695
    %v92 = vpow.pop %v91
    %93 = vadd.xlane.f32.xlu0 %v92
    %v94 = vpop.xlane.xlu0 %93
    %v95 = vlog2.pop %v94
    %v96 = vmul.f32 %v95, 0.6931472
    %v97 = vsub.f32 %v90, %v96
    %v98 = vmul.f32 %v97, 1.442695
    %v99 = vpow.pop %v98
    %v100 = vld [vmem:[#allocation8] sm:$0xf]
    %v101 = vld [vmem:[#allocation8 + $0x4] sm:$0xf]
    %v102 = vld [vmem:[#allocation8 + $0x8] sm:$0xf]
    %v103 = vld [vmem:[#allocation8 + $0xc] sm:$0xf]
    %v104 = vld [vmem:[#allocation8 + $0x10] sm:$0xf]
    %v105 = vld [vmem:[#allocation8 + $0x14] sm:$0xf]
    %v106 = vld [vmem:[#allocation8 + $0x18] sm:$0xf]
    %v107 = vld [vmem:[#allocation8 + $0x1c] sm:$0xf]
    %v108 = vld [vmem:[#allocation8 + $0x20] sm:$0xf]
    %v109 = vld [vmem:[#allocation8 + $0x24] sm:$0xf]
    %v110 = vld [vmem:[#allocation8 + $0x28] sm:$0xf]
    %v111 = vld [vmem:[#allocation8 + $0x2c] sm:$0xf]
    %v112 = vld [vmem:[#allocation8 + $0x30] sm:$0xf]
    %v113 = vld [vmem:[#allocation8 + $0x34] sm:$0xf]
    %v114 = vld [vmem:[#allocation8 + $0x38] sm:$0xf]
    %v115 = vld [vmem:[#allocation8 + $0x3c] sm:$0xf]
    %v116 = vld [vmem:[#allocation8 + $0x40] sm:$0xf]
    %v117 = vld [vmem:[#allocation8 + $0x44] sm:$0xf]
    %v118 = vld [vmem:[#allocation8 + $0x48] sm:$0xf]
    %v119 = vld [vmem:[#allocation8 + $0x4c] sm:$0xf]
    %v120 = vld [vmem:[#allocation8 + $0x50] sm:$0xf]
    %v121 = vld [vmem:[#allocation8 + $0x54] sm:$0xf]
    %v122 = vld [vmem:[#allocation8 + $0x58] sm:$0xf]
    %v123 = vld [vmem:[#allocation8 + $0x5c] sm:$0xf]
    %v124 = vld [vmem:[#allocation8 + $0x60] sm:$0xf]
    %v125 = vld [vmem:[#allocation8 + $0x64] sm:$0xf]
    %v126 = vld [vmem:[#allocation8 + $0x68] sm:$0xf]
    %v127 = vld [vmem:[#allocation8 + $0x6c] sm:$0xf]
    %v128 = vld [vmem:[#allocation8 + $0x70] sm:$0xf]
    %v129 = vld [vmem:[#allocation8 + $0x74] sm:$0xf]
    %v130 = vld [vmem:[#allocation8 + $0x78] sm:$0xf]
    %v131 = vld [vmem:[#allocation8 + $0x7c] sm:$0xf]
    %v132 = vld [vmem:[#allocation8 + $0x80] sm:$0xf]
    %v133 = vld [vmem:[#allocation8 + $0x84] sm:$0xf]
    %v134 = vld [vmem:[#allocation8 + $0x88] sm:$0xf]
    %v135 = vld [vmem:[#allocation8 + $0x8c] sm:$0xf]
    %v136 = vld [vmem:[#allocation8 + $0x90] sm:$0xf]
    %v137 = vld [vmem:[#allocation8 + $0x94] sm:$0xf]
    %v138 = vld [vmem:[#allocation8 + $0x98] sm:$0xf]
    %v139 = vld [vmem:[#allocation8 + $0x9c] sm:$0xf]
    %v140 = vld [vmem:[#allocation8 + $0xa0] sm:$0xf]
    %v141 = vld [vmem:[#allocation8 + $0xa4] sm:$0xf]
    %v142 = vld [vmem:[#allocation8 + $0xa8] sm:$0xf]
    %v143 = vld [vmem:[#allocation8 + $0xac] sm:$0xf]
    %v144 = vld [vmem:[#allocation8 + $0xb0] sm:$0xf]
    %v145 = vld [vmem:[#allocation8 + $0xb4] sm:$0xf]
    %v146 = vld [vmem:[#allocation8 + $0xb8] sm:$0xf]
    %v147 = vld [vmem:[#allocation8 + $0xbc] sm:$0xf]
    %v148 = vld [vmem:[#allocation8 + $0xc0] sm:$0xf]
    %v149 = vld [vmem:[#allocation8 + $0xc4] sm:$0xf]
    %v150 = vld [vmem:[#allocation8 + $0xc8] sm:$0xf]
    %v151 = vld [vmem:[#allocation8 + $0xcc] sm:$0xf]
    %v152 = vld [vmem:[#allocation8 + $0xd0] sm:$0xf]
    %v153 = vld [vmem:[#allocation8 + $0xd4] sm:$0xf]
    %v154 = vld [vmem:[#allocation8 + $0xd8] sm:$0xf]
    %v155 = vld [vmem:[#allocation8 + $0xdc] sm:$0xf]
    %v156 = vld [vmem:[#allocation8 + $0xe0] sm:$0xf]
    %v157 = vld [vmem:[#allocation8 + $0xe4] sm:$0xf]
    %v158 = vld [vmem:[#allocation8 + $0xe8] sm:$0xf]
    %v159 = vld [vmem:[#allocation8 + $0xec] sm:$0xf]
    %v160 = vld [vmem:[#allocation8 + $0xf0] sm:$0xf]
    %v161 = vld [vmem:[#allocation8 + $0xf4] sm:$0xf]
    %v162 = vld [vmem:[#allocation8 + $0xf8] sm:$0xf]
    %v163 = vld [vmem:[#allocation8 + $0xfc] sm:$0xf]
    %v164 = vld [vmem:[#allocation8 + $0x100] sm:$0xf]
    %v165 = vld [vmem:[#allocation8 + $0x104] sm:$0xf]
    %v166 = vld [vmem:[#allocation8 + $0x108] sm:$0xf]
    %v167 = vld [vmem:[#allocation8 + $0x10c] sm:$0xf]
    %v168 = vld [vmem:[#allocation8 + $0x110] sm:$0xf]
    %v169 = vld [vmem:[#allocation8 + $0x114] sm:$0xf]
    %v170 = vld [vmem:[#allocation8 + $0x118] sm:$0xf]
    %v171 = vld [vmem:[#allocation8 + $0x11c] sm:$0xf]
    %v172 = vld [vmem:[#allocation8 + $0x120] sm:$0xf]
    %v173 = vld [vmem:[#allocation8 + $0x124] sm:$0xf]
    %v174 = vld [vmem:[#allocation8 + $0x128] sm:$0xf]
    %v175 = vld [vmem:[#allocation8 + $0x12c] sm:$0xf]
    %v176 = vld [vmem:[#allocation8 + $0x130] sm:$0xf]
    %v177 = vld [vmem:[#allocation8 + $0x134] sm:$0xf]
    %v178 = vld [vmem:[#allocation8 + $0x138] sm:$0xf]
    %v179 = vld [vmem:[#allocation8 + $0x13c] sm:$0xf]
    %v180 = vld [vmem:[#allocation8 + $0x140] sm:$0xf]
    %v181 = vld [vmem:[#allocation8 + $0x144] sm:$0xf]
    %v182 = vld [vmem:[#allocation8 + $0x148] sm:$0xf]
    %v183 = vld [vmem:[#allocation8 + $0x14c] sm:$0xf]
    %v184 = vld [vmem:[#allocation8 + $0x150] sm:$0xf]
    %v185 = vld [vmem:[#allocation8 + $0x154] sm:$0xf]
    %v186 = vld [vmem:[#allocation8 + $0x158] sm:$0xf]
    %v187 = vld [vmem:[#allocation8 + $0x15c] sm:$0xf]
    %v188 = vld [vmem:[#allocation8 + $0x160] sm:$0xf]
    %v189 = vld [vmem:[#allocation8 + $0x164] sm:$0xf]
    %v190 = vld [vmem:[#allocation8 + $0x168] sm:$0xf]
    %v191 = vld [vmem:[#allocation8 + $0x16c] sm:$0xf]
    %v192 = vld [vmem:[#allocation8 + $0x170] sm:$0xf]
    %v193 = vld [vmem:[#allocation8 + $0x174] sm:$0xf]
    %v194 = vld [vmem:[#allocation8 + $0x178] sm:$0xf]
    %v195 = vld [vmem:[#allocation8 + $0x17c] sm:$0xf]
    %v196 = vld [vmem:[#allocation8 + $0x180] sm:$0xf]
    %v197 = vld [vmem:[#allocation8 + $0x184] sm:$0xf]
    %v198 = vld [vmem:[#allocation8 + $0x188] sm:$0xf]
    %v199 = vld [vmem:[#allocation8 + $0x18c] sm:$0xf]
    %v200 = vld [vmem:[#allocation8 + $0x190] sm:$0xf]
    %v201 = vld [vmem:[#allocation8 + $0x194] sm:$0xf]
    %v202 = vld [vmem:[#allocation8 + $0x198] sm:$0xf]
    %v203 = vld [vmem:[#allocation8 + $0x19c] sm:$0xf]
    %v204 = vld [vmem:[#allocation8 + $0x1a0] sm:$0xf]
    %v205 = vld [vmem:[#allocation8 + $0x1a4] sm:$0xf]
    %v206 = vld [vmem:[#allocation8 + $0x1a8] sm:$0xf]
    %v207 = vld [vmem:[#allocation8 + $0x1ac] sm:$0xf]
    %v208 = vld [vmem:[#allocation8 + $0x1b0] sm:$0xf]
    %v209 = vld [vmem:[#allocation8 + $0x1b4] sm:$0xf]
    %v210 = vld [vmem:[#allocation8 + $0x1b8] sm:$0xf]
    %v211 = vld [vmem:[#allocation8 + $0x1bc] sm:$0xf]
    %v212 = vld [vmem:[#allocation8 + $0x1c0] sm:$0xf]
    %v213 = vld [vmem:[#allocation8 + $0x1c4] sm:$0xf]
    %v214 = vld [vmem:[#allocation8 + $0x1c8] sm:$0xf]
    %v215 = vld [vmem:[#allocation8 + $0x1cc] sm:$0xf]
    %v216 = vld [vmem:[#allocation8 + $0x1d0] sm:$0xf]
    %v217 = vld [vmem:[#allocation8 + $0x1d4] sm:$0xf]
    %v218 = vld [vmem:[#allocation8 + $0x1d8] sm:$0xf]
    %v219 = vld [vmem:[#allocation8 + $0x1dc] sm:$0xf]
    %v220 = vld [vmem:[#allocation8 + $0x1e0] sm:$0xf]
    %v221 = vld [vmem:[#allocation8 + $0x1e4] sm:$0xf]
    %v222 = vld [vmem:[#allocation8 + $0x1e8] sm:$0xf]
    %v223 = vld [vmem:[#allocation8 + $0x1ec] sm:$0xf]
    %v224 = vld [vmem:[#allocation8 + $0x1f0] sm:$0xf]
    %v225 = vld [vmem:[#allocation8 + $0x1f4] sm:$0xf]
    %v226 = vld [vmem:[#allocation8 + $0x1f8] sm:$0xf]
    %v227 = vld [vmem:[#allocation8 + $0x1fc] sm:$0xf]
    %v228 = vld [vmem:[#allocation10] sm:$0xff]
    %v229 = vld [vmem:[#allocation10 + $0x8] sm:$0xff]
    %v230 = vld [vmem:[#allocation10 + $0x10] sm:$0xff]
    %v231 = vld [vmem:[#allocation10 + $0x18] sm:$0xff]
    %v232 = vld [vmem:[#allocation10 + $0x20] sm:$0xff]
    %v233 = vld [vmem:[#allocation10 + $0x28] sm:$0xff]
    %v234 = vld [vmem:[#allocation10 + $0x30] sm:$0xff]
    %v235 = vld [vmem:[#allocation10 + $0x38] sm:$0xff]
    %v236 = vld [vmem:[#allocation10 + $0x40] sm:$0xff]
    %v237 = vld [vmem:[#allocation10 + $0x48] sm:$0xff]
    %v238 = vld [vmem:[#allocation10 + $0x50] sm:$0xff]
    %v239 = vld [vmem:[#allocation10 + $0x58] sm:$0xff]
    %v240 = vld [vmem:[#allocation10 + $0x60] sm:$0xff]
    %v241 = vld [vmem:[#allocation10 + $0x68] sm:$0xff]
    %v242 = vld [vmem:[#allocation10 + $0x70] sm:$0xff]
    %v243 = vld [vmem:[#allocation10 + $0x78] sm:$0xff]
    %v244 = vld [vmem:[#allocation10 + $0x80] sm:$0xff]
    %v245 = vld [vmem:[#allocation10 + $0x88] sm:$0xff]
    %v246 = vld [vmem:[#allocation10 + $0x90] sm:$0xff]
    %v247 = vld [vmem:[#allocation10 + $0x98] sm:$0xff]
    %v248 = vld [vmem:[#allocation10 + $0xa0] sm:$0xff]
    %v249 = vld [vmem:[#allocation10 + $0xa8] sm:$0xff]
    %v250 = vld [vmem:[#allocation10 + $0xb0] sm:$0xff]
    %v251 = vld [vmem:[#allocation10 + $0xb8] sm:$0xff]
    %v252 = vld [vmem:[#allocation10 + $0xc0] sm:$0xff]
    %v253 = vld [vmem:[#allocation10 + $0xc8] sm:$0xff]
    %v254 = vld [vmem:[#allocation10 + $0xd0] sm:$0xff]
    %v255 = vld [vmem:[#allocation10 + $0xd8] sm:$0xff]
    %v256 = vld [vmem:[#allocation10 + $0xe0] sm:$0xff]
    %v257 = vld [vmem:[#allocation10 + $0xe8] sm:$0xff]
    %v258 = vld [vmem:[#allocation10 + $0xf0] sm:$0xff]
    %v259 = vld [vmem:[#allocation10 + $0xf8] sm:$0xff]
    %v260 = vld [vmem:[#allocation10 + $0x100] sm:$0xff]
    %v261 = vld [vmem:[#allocation10 + $0x108] sm:$0xff]
    %v262 = vld [vmem:[#allocation10 + $0x110] sm:$0xff]
    %v263 = vld [vmem:[#allocation10 + $0x118] sm:$0xff]
    %v264 = vld [vmem:[#allocation10 + $0x120] sm:$0xff]
    %v265 = vld [vmem:[#allocation10 + $0x128] sm:$0xff]
    %v266 = vld [vmem:[#allocation10 + $0x130] sm:$0xff]
    %v267 = vld [vmem:[#allocation10 + $0x138] sm:$0xff]
    %v268 = vld [vmem:[#allocation10 + $0x140] sm:$0xff]
    %v269 = vld [vmem:[#allocation10 + $0x148] sm:$0xff]
    %v270 = vld [vmem:[#allocation10 + $0x150] sm:$0xff]
    %v271 = vld [vmem:[#allocation10 + $0x158] sm:$0xff]
    %v272 = vld [vmem:[#allocation10 + $0x160] sm:$0xff]
    %v273 = vld [vmem:[#allocation10 + $0x168] sm:$0xff]
    %v274 = vld [vmem:[#allocation10 + $0x170] sm:$0xff]
    %v275 = vld [vmem:[#allocation10 + $0x178] sm:$0xff]
    %v276 = vld [vmem:[#allocation10 + $0x180] sm:$0xff]
    %v277 = vld [vmem:[#allocation10 + $0x188] sm:$0xff]
    %v278 = vld [vmem:[#allocation10 + $0x190] sm:$0xff]
    %v279 = vld [vmem:[#allocation10 + $0x198] sm:$0xff]
    %v280 = vld [vmem:[#allocation10 + $0x1a0] sm:$0xff]
    %v281 = vld [vmem:[#allocation10 + $0x1a8] sm:$0xff]
    %v282 = vld [vmem:[#allocation10 + $0x1b0] sm:$0xff]
    %v283 = vld [vmem:[#allocation10 + $0x1b8] sm:$0xff]
    %v284 = vld [vmem:[#allocation10 + $0x1c0] sm:$0xff]
    %v285 = vld [vmem:[#allocation10 + $0x1c8] sm:$0xff]
    %v286 = vld [vmem:[#allocation10 + $0x1d0] sm:$0xff]
    %v287 = vld [vmem:[#allocation10 + $0x1d8] sm:$0xff]
    %v288 = vld [vmem:[#allocation10 + $0x1e0] sm:$0xff]
    %v289 = vld [vmem:[#allocation10 + $0x1e8] sm:$0xff]
    %v290 = vld [vmem:[#allocation10 + $0x1f0] sm:$0xff]
    %v291 = vld [vmem:[#allocation10 + $0x1f8] sm:$0xff]
    %v292 = vld [vmem:[#allocation2] sm:$0xff]
    %v293 = vld [vmem:[#allocation2 + $0x8] sm:$0xff]
    %v294 = vld [vmem:[#allocation2 + $0x10] sm:$0xff]
    %v295 = vld [vmem:[#allocation2 + $0x18] sm:$0xff]
    %v296 = vld [vmem:[%s5] sm:$0x1]
    %v298 = vlaneseq
    %v299 = vshrl.u32 %v298, 7
    %v300 = vsub.s32 0, %v299
    %v301 = vrot.slane %v296, %v300
    %v307 = vunpack.c.l.b16 %v292
    %v308 = vunpack.c.h.b16 %v292
    %v309 = vunpack.c.l.b16 %v293
    %v310 = vunpack.c.h.b16 %v293
    %v311 = vunpack.c.l.b16 %v294
    %v312 = vunpack.c.h.b16 %v294
    %v313 = vunpack.c.l.b16 %v295
    %v314 = vunpack.c.h.b16 %v295
    %v315 = vpack.c.b16 %v307, %v307
    %v316 = vpack.c.b16 %v308, %v308
    %v317 = vpack.c.b16 %v309, %v309
    %v318 = vpack.c.b16 %v310, %v310
    %v319 = vpack.c.b16 %v311, %v311
    %v320 = vpack.c.b16 %v312, %v312
    %v321 = vpack.c.b16 %v313, %v313
    %v322 = vpack.c.b16 %v314, %v314
    %v459 = vunpack.c.l.b16 %v100
    %v460 = vunpack.c.l.b16 %v101
    %v461 = vunpack.c.l.b16 %v102
    %v462 = vunpack.c.l.b16 %v103
    %v463 = vunpack.c.l.b16 %v104
    %v464 = vunpack.c.l.b16 %v105
    %v465 = vunpack.c.l.b16 %v106
    %v466 = vunpack.c.l.b16 %v107
    %v467 = vunpack.c.l.b16 %v108
    %v468 = vunpack.c.l.b16 %v109
    %v469 = vunpack.c.l.b16 %v110
    %v470 = vunpack.c.l.b16 %v111
    %v471 = vunpack.c.l.b16 %v112
    %v472 = vunpack.c.l.b16 %v113
    %v473 = vunpack.c.l.b16 %v114
    %v474 = vunpack.c.l.b16 %v115
    %v475 = vunpack.c.l.b16 %v116
    %v476 = vunpack.c.l.b16 %v117
    %v477 = vunpack.c.l.b16 %v118
    %v478 = vunpack.c.l.b16 %v119
    %v479 = vunpack.c.l.b16 %v120
    %v480 = vunpack.c.l.b16 %v121
    %v481 = vunpack.c.l.b16 %v122
    %v482 = vunpack.c.l.b16 %v123
    %v483 = vunpack.c.l.b16 %v124
    %v484 = vunpack.c.l.b16 %v125
    %v485 = vunpack.c.l.b16 %v126
    %v486 = vunpack.c.l.b16 %v127
    %v487 = vunpack.c.l.b16 %v128
    %v488 = vunpack.c.l.b16 %v129
    %v489 = vunpack.c.l.b16 %v130
    %v490 = vunpack.c.l.b16 %v131
    %v491 = vunpack.c.l.b16 %v132
    %v492 = vunpack.c.l.b16 %v133
    %v493 = vunpack.c.l.b16 %v134
    %v494 = vunpack.c.l.b16 %v135
    %v495 = vunpack.c.l.b16 %v136
    %v496 = vunpack.c.l.b16 %v137
    %v497 = vunpack.c.l.b16 %v138
    %v498 = vunpack.c.l.b16 %v139
    %v499 = vunpack.c.l.b16 %v140
    %v500 = vunpack.c.l.b16 %v141
    %v501 = vunpack.c.l.b16 %v142
    %v502 = vunpack.c.l.b16 %v143
    %v503 = vunpack.c.l.b16 %v144
    %v504 = vunpack.c.l.b16 %v145
    %v505 = vunpack.c.l.b16 %v146
    %v506 = vunpack.c.l.b16 %v147
    %v507 = vunpack.c.l.b16 %v148
    %v508 = vunpack.c.l.b16 %v149
    %v509 = vunpack.c.l.b16 %v150
    %v510 = vunpack.c.l.b16 %v151
    %v511 = vunpack.c.l.b16 %v152
    %v512 = vunpack.c.l.b16 %v153
    %v513 = vunpack.c.l.b16 %v154
    %v514 = vunpack.c.l.b16 %v155
    %v515 = vunpack.c.l.b16 %v156
    %v516 = vunpack.c.l.b16 %v157
    %v517 = vunpack.c.l.b16 %v158
    %v518 = vunpack.c.l.b16 %v159
    %v519 = vunpack.c.l.b16 %v160
    %v520 = vunpack.c.l.b16 %v161
    %v521 = vunpack.c.l.b16 %v162
    %v522 = vunpack.c.l.b16 %v163
    %v523 = vunpack.c.l.b16 %v164
    %v524 = vunpack.c.l.b16 %v165
    %v525 = vunpack.c.l.b16 %v166
    %v526 = vunpack.c.l.b16 %v167
    %v527 = vunpack.c.l.b16 %v168
    %v528 = vunpack.c.l.b16 %v169
    %v529 = vunpack.c.l.b16 %v170
    %v530 = vunpack.c.l.b16 %v171
    %v531 = vunpack.c.l.b16 %v172
    %v532 = vunpack.c.l.b16 %v173
    %v533 = vunpack.c.l.b16 %v174
    %v534 = vunpack.c.l.b16 %v175
    %v535 = vunpack.c.l.b16 %v176
    %v536 = vunpack.c.l.b16 %v177
    %v537 = vunpack.c.l.b16 %v178
    %v538 = vunpack.c.l.b16 %v179
    %v539 = vunpack.c.l.b16 %v180
    %v540 = vunpack.c.l.b16 %v181
    %v541 = vunpack.c.l.b16 %v182
    %v542 = vunpack.c.l.b16 %v183
    %v543 = vunpack.c.l.b16 %v184
    %v544 = vunpack.c.l.b16 %v185
    %v545 = vunpack.c.l.b16 %v186
    %v546 = vunpack.c.l.b16 %v187
    %v547 = vunpack.c.l.b16 %v188
    %v548 = vunpack.c.l.b16 %v189
    %v549 = vunpack.c.l.b16 %v190
    %v550 = vunpack.c.l.b16 %v191
    %v551 = vunpack.c.l.b16 %v192
    %v552 = vunpack.c.l.b16 %v193
    %v553 = vunpack.c.l.b16 %v194
    %v554 = vunpack.c.l.b16 %v195
    %v555 = vunpack.c.l.b16 %v196
    %v556 = vunpack.c.l.b16 %v197
    %v557 = vunpack.c.l.b16 %v198
    %v558 = vunpack.c.l.b16 %v199
    %v559 = vunpack.c.l.b16 %v200
    %v560 = vunpack.c.l.b16 %v201
    %v561 = vunpack.c.l.b16 %v202
    %v562 = vunpack.c.l.b16 %v203
    %v563 = vunpack.c.l.b16 %v204
    %v564 = vunpack.c.l.b16 %v205
    %v565 = vunpack.c.l.b16 %v206
    %v566 = vunpack.c.l.b16 %v207
    %v567 = vunpack.c.l.b16 %v208
    %v568 = vunpack.c.l.b16 %v209
    %v569 = vunpack.c.l.b16 %v210
    %v570 = vunpack.c.l.b16 %v211
    %v571 = vunpack.c.l.b16 %v212
    %v572 = vunpack.c.l.b16 %v213
    %v573 = vunpack.c.l.b16 %v214
    %v574 = vunpack.c.l.b16 %v215
    %v575 = vunpack.c.l.b16 %v216
    %v576 = vunpack.c.l.b16 %v217
    %v577 = vunpack.c.l.b16 %v218
    %v578 = vunpack.c.l.b16 %v219
    %v579 = vunpack.c.l.b16 %v220
    %v580 = vunpack.c.l.b16 %v221
    %v581 = vunpack.c.l.b16 %v222
    %v582 = vunpack.c.l.b16 %v223
    %v583 = vunpack.c.l.b16 %v224
    %v584 = vunpack.c.l.b16 %v225
    %v585 = vunpack.c.l.b16 %v226
    %v586 = vunpack.c.l.b16 %v227
    %v587 = vpack.c.b16 %v460, %v459
    %v588 = vpack.c.b16 %v462, %v461
    %v589 = vpack.c.b16 %v464, %v463
    %v590 = vpack.c.b16 %v466, %v465
    %v591 = vpack.c.b16 %v468, %v467
    %v592 = vpack.c.b16 %v470, %v469
    %v593 = vpack.c.b16 %v472, %v471
    %v594 = vpack.c.b16 %v474, %v473
    %v595 = vpack.c.b16 %v476, %v475
    %v596 = vpack.c.b16 %v478, %v477
    %v597 = vpack.c.b16 %v480, %v479
    %v598 = vpack.c.b16 %v482, %v481
    %v599 = vpack.c.b16 %v484, %v483
    %v600 = vpack.c.b16 %v486, %v485
    %v601 = vpack.c.b16 %v488, %v487
    %v602 = vpack.c.b16 %v490, %v489
    %v603 = vpack.c.b16 %v492, %v491
    %v604 = vpack.c.b16 %v494, %v493
    %v605 = vpack.c.b16 %v496, %v495
    %v606 = vpack.c.b16 %v498, %v497
    %v607 = vpack.c.b16 %v500, %v499
    %v608 = vpack.c.b16 %v502, %v501
    %v609 = vpack.c.b16 %v504, %v503
    %v610 = vpack.c.b16 %v506, %v505
    %v611 = vpack.c.b16 %v508, %v507
    %v612 = vpack.c.b16 %v510, %v509
    %v613 = vpack.c.b16 %v512, %v511
    %v614 = vpack.c.b16 %v514, %v513
    %v615 = vpack.c.b16 %v516, %v515
    %v616 = vpack.c.b16 %v518, %v517
    %v617 = vpack.c.b16 %v520, %v519
    %v618 = vpack.c.b16 %v522, %v521
    %v619 = vpack.c.b16 %v524, %v523
    %v620 = vpack.c.b16 %v526, %v525
    %v621 = vpack.c.b16 %v528, %v527
    %v622 = vpack.c.b16 %v530, %v529
    %v623 = vpack.c.b16 %v532, %v531
    %v624 = vpack.c.b16 %v534, %v533
    %v625 = vpack.c.b16 %v536, %v535
    %v626 = vpack.c.b16 %v538, %v537
    %v627 = vpack.c.b16 %v540, %v539
    %v628 = vpack.c.b16 %v542, %v541
    %v629 = vpack.c.b16 %v544, %v543
    %v630 = vpack.c.b16 %v546, %v545
    %v631 = vpack.c.b16 %v548, %v547
    %v632 = vpack.c.b16 %v550, %v549
    %v633 = vpack.c.b16 %v552, %v551
    %v634 = vpack.c.b16 %v554, %v553
    %v635 = vpack.c.b16 %v556, %v555
    %v636 = vpack.c.b16 %v558, %v557
    %v637 = vpack.c.b16 %v560, %v559
    %v638 = vpack.c.b16 %v562, %v561
    %v639 = vpack.c.b16 %v564, %v563
    %v640 = vpack.c.b16 %v566, %v565
    %v641 = vpack.c.b16 %v568, %v567
    %v642 = vpack.c.b16 %v570, %v569
    %v643 = vpack.c.b16 %v572, %v571
    %v644 = vpack.c.b16 %v574, %v573
    %v645 = vpack.c.b16 %v576, %v575
    %v646 = vpack.c.b16 %v578, %v577
    %v647 = vpack.c.b16 %v580, %v579
    %v648 = vpack.c.b16 %v582, %v581
    %v649 = vpack.c.b16 %v584, %v583
    %v650 = vpack.c.b16 %v586, %v585
    %715 = vmatprep.subr.bf16.mxu0 0
    %716 = vmatpush1.bf16.msra.mxu0 %v594
    %717 = vmatprep.subr.bf16.mxu0 0
    %718 = vmatpush1.bf16.msra.mxu0 %v593
    %719 = vmatprep.subr.bf16.mxu0 0
    %720 = vmatpush1.bf16.msra.mxu0 %v592
    %721 = vmatprep.subr.bf16.mxu0 0
    %722 = vmatpush1.bf16.msra.mxu0 %v591
    %723 = vmatprep.subr.bf16.mxu0 0
    %724 = vmatpush1.bf16.msra.mxu0 %v590
    %725 = vmatprep.subr.bf16.mxu0 0
    %726 = vmatpush1.bf16.msra.mxu0 %v589
    %727 = vmatprep.subr.bf16.mxu0 0
    %728 = vmatpush1.bf16.msra.mxu0 %v588
    %729 = vmatprep.subr.bf16.mxu0 0
    %730 = vmatpush1.bf16.msra.mxu0 %v587
    %731 = vmatprep.subr.bf16.mxu0 0
    %732 = vmatpush2.bf16.msra.mxu0 %v602
    %733 = vmatprep.subr.bf16.mxu0 0
    %734 = vmatpush2.bf16.msra.mxu0 %v601
    %735 = vmatprep.subr.bf16.mxu0 0
    %736 = vmatpush2.bf16.msra.mxu0 %v600
    %737 = vmatprep.subr.bf16.mxu0 0
    %738 = vmatpush2.bf16.msra.mxu0 %v599
    %739 = vmatprep.subr.bf16.mxu0 0
    %740 = vmatpush2.bf16.msra.mxu0 %v598
    %741 = vmatprep.subr.bf16.mxu0 0
    %742 = vmatpush2.bf16.msra.mxu0 %v597
    %743 = vmatprep.subr.bf16.mxu0 0
    %744 = vmatpush2.bf16.msra.mxu0 %v596
    %745 = vmatprep.subr.bf16.mxu0 0
    %746 = vmatpush2.bf16.msra.mxu0 %v595
    %747 = vmatprep.mubr.bf16.mxu0 %v316
    %748 = vmatmul.mubr.bf16.gmra.mxu0 %v315
    %v749 = vpop.f32.mrf.mxu0
    %v750 = vadd.f32 %v301, %v749
    %v751 = vpop.f32.mrf.mxu0
    %v752 = vpop.f32.mrf.mxu0
    %v753 = vpop.f32.mrf.mxu0
    %754 = vdwg.mxu0
    %755 = vmatprep.subr.bf16.mxu0 0
    %756 = vmatpush1.bf16.msra.mxu0 %v610
    %757 = vmatprep.subr.bf16.mxu0 0
    %758 = vmatpush1.bf16.msra.mxu0 %v609
    %759 = vmatprep.subr.bf16.mxu0 0
    %760 = vmatpush1.bf16.msra.mxu0 %v608
    %761 = vmatprep.subr.bf16.mxu0 0
    %762 = vmatpush1.bf16.msra.mxu0 %v607
    %763 = vmatprep.subr.bf16.mxu0 0
    %764 = vmatpush1.bf16.msra.mxu0 %v606
    %765 = vmatprep.subr.bf16.mxu0 0
    %766 = vmatpush1.bf16.msra.mxu0 %v605
    %767 = vmatprep.subr.bf16.mxu0 0
    %768 = vmatpush1.bf16.msra.mxu0 %v604
    %769 = vmatprep.subr.bf16.mxu0 0
    %770 = vmatpush1.bf16.msra.mxu0 %v603
    %771 = vmatprep.subr.bf16.mxu0 0
    %772 = vmatpush2.bf16.msra.mxu0 %v618
    %773 = vmatprep.subr.bf16.mxu0 0
    %774 = vmatpush2.bf16.msra.mxu0 %v617
    %775 = vmatprep.subr.bf16.mxu0 0
    %776 = vmatpush2.bf16.msra.mxu0 %v616
    %777 = vmatprep.subr.bf16.mxu0 0
    %778 = vmatpush2.bf16.msra.mxu0 %v615
    %779 = vmatprep.subr.bf16.mxu0 0
    %780 = vmatpush2.bf16.msra.mxu0 %v614
    %781 = vmatprep.subr.bf16.mxu0 0
    %782 = vmatpush2.bf16.msra.mxu0 %v613
    %783 = vmatprep.subr.bf16.mxu0 0
    %784 = vmatpush2.bf16.msra.mxu0 %v612
    %785 = vmatprep.subr.bf16.mxu0 0
    %786 = vmatpush2.bf16.msra.mxu0 %v611
    %787 = vmatprep.mubr.bf16.mxu0 %v318
    %788 = vmatmul.mubr.bf16.gmra.mxu0 %v317
    %v789 = vpop.f32.mrf.mxu0
    %v790 = vadd.f32 %v750, %v789
    %v791 = vpop.f32.mrf.mxu0
    %v792 = vpop.f32.mrf.mxu0
    %v793 = vpop.f32.mrf.mxu0
    %794 = vdwg.mxu0
    %795 = vmatprep.subr.bf16.mxu0 0
    %796 = vmatpush1.bf16.msra.mxu0 %v626
    %797 = vmatprep.subr.bf16.mxu0 0
    %798 = vmatpush1.bf16.msra.mxu0 %v625
    %799 = vmatprep.subr.bf16.mxu0 0
    %800 = vmatpush1.bf16.msra.mxu0 %v624
    %801 = vmatprep.subr.bf16.mxu0 0
    %802 = vmatpush1.bf16.msra.mxu0 %v623
    %803 = vmatprep.subr.bf16.mxu0 0
    %804 = vmatpush1.bf16.msra.mxu0 %v622
    %805 = vmatprep.subr.bf16.mxu0 0
    %806 = vmatpush1.bf16.msra.mxu0 %v621
    %807 = vmatprep.subr.bf16.mxu0 0
    %808 = vmatpush1.bf16.msra.mxu0 %v620
    %809 = vmatprep.subr.bf16.mxu0 0
    %810 = vmatpush1.bf16.msra.mxu0 %v619
    %811 = vmatprep.subr.bf16.mxu0 0
    %812 = vmatpush2.bf16.msra.mxu0 %v634
    %813 = vmatprep.subr.bf16.mxu0 0
    %814 = vmatpush2.bf16.msra.mxu0 %v633
    %815 = vmatprep.subr.bf16.mxu0 0
    %816 = vmatpush2.bf16.msra.mxu0 %v632
    %817 = vmatprep.subr.bf16.mxu0 0
    %818 = vmatpush2.bf16.msra.mxu0 %v631
    %819 = vmatprep.subr.bf16.mxu0 0
    %820 = vmatpush2.bf16.msra.mxu0 %v630
    %821 = vmatprep.subr.bf16.mxu0 0
    %822 = vmatpush2.bf16.msra.mxu0 %v629
    %823 = vmatprep.subr.bf16.mxu0 0
    %824 = vmatpush2.bf16.msra.mxu0 %v628
    %825 = vmatprep.subr.bf16.mxu0 0
    %826 = vmatpush2.bf16.msra.mxu0 %v627
    %827 = vmatprep.mubr.bf16.mxu0 %v320
    %828 = vmatmul.mubr.bf16.gmra.mxu0 %v319
    %v829 = vpop.f32.mrf.mxu0
    %v830 = vadd.f32 %v790, %v829
    %v831 = vpop.f32.mrf.mxu0
    %v832 = vpop.f32.mrf.mxu0
    %v833 = vpop.f32.mrf.mxu0
    %834 = vdwg.mxu0
    %835 = vmatprep.subr.bf16.mxu0 0
    %836 = vmatpush1.bf16.msra.mxu0 %v642
    %837 = vmatprep.subr.bf16.mxu0 0
    %838 = vmatpush1.bf16.msra.mxu0 %v641
    %839 = vmatprep.subr.bf16.mxu0 0
    %840 = vmatpush1.bf16.msra.mxu0 %v640
    %841 = vmatprep.subr.bf16.mxu0 0
    %842 = vmatpush1.bf16.msra.mxu0 %v639
    %843 = vmatprep.subr.bf16.mxu0 0
    %844 = vmatpush1.bf16.msra.mxu0 %v638
    %845 = vmatprep.subr.bf16.mxu0 0
    %846 = vmatpush1.bf16.msra.mxu0 %v637
    %847 = vmatprep.subr.bf16.mxu0 0
    %848 = vmatpush1.bf16.msra.mxu0 %v636
    %849 = vmatprep.subr.bf16.mxu0 0
    %850 = vmatpush1.bf16.msra.mxu0 %v635
    %851 = vmatprep.subr.bf16.mxu0 0
    %852 = vmatpush2.bf16.msra.mxu0 %v650
    %853 = vmatprep.subr.bf16.mxu0 0
    %854 = vmatpush2.bf16.msra.mxu0 %v649
    %855 = vmatprep.subr.bf16.mxu0 0
    %856 = vmatpush2.bf16.msra.mxu0 %v648
    %857 = vmatprep.subr.bf16.mxu0 0
    %858 = vmatpush2.bf16.msra.mxu0 %v647
    %859 = vmatprep.subr.bf16.mxu0 0
    %860 = vmatpush2.bf16.msra.mxu0 %v646
    %861 = vmatprep.subr.bf16.mxu0 0
    %862 = vmatpush2.bf16.msra.mxu0 %v645
    %863 = vmatprep.subr.bf16.mxu0 0
    %864 = vmatpush2.bf16.msra.mxu0 %v644
    %865 = vmatprep.subr.bf16.mxu0 0
    %866 = vmatpush2.bf16.msra.mxu0 %v643
    %867 = vmatprep.mubr.bf16.mxu0 %v322
    %868 = vmatmul.mubr.bf16.gmra.mxu0 %v321
    %v869 = vpop.f32.mrf.mxu0
    %v870 = vadd.f32 %v830, %v869
    %v871 = vpop.f32.mrf.mxu0
    %v872 = vpop.f32.mrf.mxu0
    %v873 = vpop.f32.mrf.mxu0
    %874 = vdwg.mxu0
    %v875 = vld [vmem:[#allocation5] sm:$0xff]
    %v876 = vld [vmem:[#allocation5 + $0x8] sm:$0xff]
    %v877 = vld [vmem:[#allocation5 + $0x10] sm:$0xff]
    %v878 = vld [vmem:[#allocation5 + $0x18] sm:$0xff]
    %v879 = vld [vmem:[#allocation5 + $0x20] sm:$0xff]
    %v880 = vld [vmem:[#allocation5 + $0x28] sm:$0xff]
    %v881 = vld [vmem:[#allocation5 + $0x30] sm:$0xff]
    %v882 = vld [vmem:[#allocation5 + $0x38] sm:$0xff]
    %v883 = vmax.f32 %v875, %v879
    %v884 = vmax.f32 %v876, %v880
    %v885 = vmax.f32 %v877, %v881
    %v886 = vmax.f32 %v878, %v882
    %v887 = vmax.f32 %v883, %v884
    %v888 = vmax.f32 %v885, %v886
    %v889 = vmax.f32 %v887, %v888
    %890 = vmax.xlane.f32.xlu0 %v889
    %v891 = vpop.xlane.xlu0 %890
    %v892 = vadd.f32 %v891, 1e-12
    %v893 = vrcp.pop %v892
    %v894 = vmul.f32 %v875, %v893
    %v895 = vmul.f32 %v876, %v893
    %v896 = vmul.f32 %v877, %v893
    %v897 = vmul.f32 %v878, %v893
    %v898 = vmul.f32 %v879, %v893
    %v899 = vmul.f32 %v880, %v893
    %v900 = vmul.f32 %v881, %v893
    %v901 = vmul.f32 %v882, %v893
    %v902 = vmul.f32 %v894, %v894
    %v903 = vmul.f32 %v895, %v895
    %v904 = vmul.f32 %v896, %v896
    %v905 = vmul.f32 %v897, %v897
    %v906 = vmul.f32 %v898, %v898
    %v907 = vmul.f32 %v899, %v899
    %v908 = vmul.f32 %v900, %v900
    %v909 = vmul.f32 %v901, %v901
    %v910 = vadd.f32 %v902, %v903
    %v911 = vadd.f32 %v910, %v904
    %v912 = vadd.f32 %v911, %v905
    %v913 = vadd.f32 %v912, %v906
    %v914 = vadd.f32 %v913, %v907
    %v915 = vadd.f32 %v914, %v908
    %v916 = vadd.f32 %v915, %v909
    %917 = vadd.xlane.f32.xlu0 %v916
    %v918 = vpop.xlane.xlu0 %917
    %v919 = vrsqrt.pop %v918
    %v920 = vmul.f32 %v918, %v919
    %vm921 = vcmp.eq.f32.partialorder %v918, inf
    %v922 = vsel %vm921, %v918, %v920
    %vm923 = vcmp.eq.f32.partialorder %v918, 0.0
    %v924 = vand.u32 %v918, 2147483648
    %v925 = vsel %vm923, %v924, %v922
    %v926 = vadd.f32 %v925, 1e-06
    %v927 = vrcp.pop %v926
    %v928 = vmul.f32 1e-06, %v927
    %v929 = vmul.f32 %v894, %v928
    %v930 = vmul.f32 %v895, %v928
    %v931 = vmul.f32 %v896, %v928
    %v932 = vmul.f32 %v897, %v928
    %v933 = vmul.f32 %v898, %v928
    %v934 = vmul.f32 %v899, %v928
    %v935 = vmul.f32 %v900, %v928
    %v936 = vmul.f32 %v901, %v928
    %v937 = vpack.c.bf16 %v929, %v929
    %v938 = vpack.c.bf16 %v930, %v930
    %v939 = vpack.c.bf16 %v931, %v931
    %v940 = vpack.c.bf16 %v932, %v932
    %v941 = vpack.c.bf16 %v933, %v933
    %v942 = vpack.c.bf16 %v934, %v934
    %v943 = vpack.c.bf16 %v935, %v935
    %v944 = vpack.c.bf16 %v936, %v936
    %945 = vmatprep.subr.bf16.mxu0 0
    %946 = vmatpush1.bf16.msra.mxu0 %v594
    %947 = vmatprep.subr.bf16.mxu0 0
    %948 = vmatpush1.bf16.msra.mxu0 %v593
    %949 = vmatprep.subr.bf16.mxu0 0
    %950 = vmatpush1.bf16.msra.mxu0 %v592
    %951 = vmatprep.subr.bf16.mxu0 0
    %952 = vmatpush1.bf16.msra.mxu0 %v591
    %953 = vmatprep.subr.bf16.mxu0 0
    %954 = vmatpush1.bf16.msra.mxu0 %v590
    %955 = vmatprep.subr.bf16.mxu0 0
    %956 = vmatpush1.bf16.msra.mxu0 %v589
    %957 = vmatprep.subr.bf16.mxu0 0
    %958 = vmatpush1.bf16.msra.mxu0 %v588
    %959 = vmatprep.subr.bf16.mxu0 0
    %960 = vmatpush1.bf16.msra.mxu0 %v587
    %961 = vmatprep.subr.bf16.mxu0 0
    %962 = vmatpush2.bf16.msra.mxu0 %v602
    %963 = vmatprep.subr.bf16.mxu0 0
    %964 = vmatpush2.bf16.msra.mxu0 %v601
    %965 = vmatprep.subr.bf16.mxu0 0
    %966 = vmatpush2.bf16.msra.mxu0 %v600
    %967 = vmatprep.subr.bf16.mxu0 0
    %968 = vmatpush2.bf16.msra.mxu0 %v599
    %969 = vmatprep.subr.bf16.mxu0 0
    %970 = vmatpush2.bf16.msra.mxu0 %v598
    %971 = vmatprep.subr.bf16.mxu0 0
    %972 = vmatpush2.bf16.msra.mxu0 %v597
    %973 = vmatprep.subr.bf16.mxu0 0
    %974 = vmatpush2.bf16.msra.mxu0 %v596
    %975 = vmatprep.subr.bf16.mxu0 0
    %976 = vmatpush2.bf16.msra.mxu0 %v595
    %977 = vmatprep.mubr.bf16.mxu0 %v938
    %978 = vmatmul.mubr.bf16.gmra.mxu0 %v937
    %v979 = vpop.f32.mrf.mxu0
    %v980 = vadd.f32 0.0, %v979
    %v981 = vpop.f32.mrf.mxu0
    %v982 = vpop.f32.mrf.mxu0
    %v983 = vpop.f32.mrf.mxu0
    %984 = vdwg.mxu0
    %985 = vmatprep.subr.bf16.mxu0 0
    %986 = vmatpush1.bf16.msra.mxu0 %v610
    %987 = vmatprep.subr.bf16.mxu0 0
    %988 = vmatpush1.bf16.msra.mxu0 %v609
    %989 = vmatprep.subr.bf16.mxu0 0
    %990 = vmatpush1.bf16.msra.mxu0 %v608
    %991 = vmatprep.subr.bf16.mxu0 0
    %992 = vmatpush1.bf16.msra.mxu0 %v607
    %993 = vmatprep.subr.bf16.mxu0 0
    %994 = vmatpush1.bf16.msra.mxu0 %v606
    %995 = vmatprep.subr.bf16.mxu0 0
    %996 = vmatpush1.bf16.msra.mxu0 %v605
    %997 = vmatprep.subr.bf16.mxu0 0
    %998 = vmatpush1.bf16.msra.mxu0 %v604
    %999 = vmatprep.subr.bf16.mxu0 0
    %1000 = vmatpush1.bf16.msra.mxu0 %v603
    %1001 = vmatprep.subr.bf16.mxu0 0
    %1002 = vmatpush2.bf16.msra.mxu0 %v618
    %1003 = vmatprep.subr.bf16.mxu0 0
    %1004 = vmatpush2.bf16.msra.mxu0 %v617
    %1005 = vmatprep.subr.bf16.mxu0 0
    %1006 = vmatpush2.bf16.msra.mxu0 %v616
    %1007 = vmatprep.subr.bf16.mxu0 0
    %1008 = vmatpush2.bf16.msra.mxu0 %v615
    %1009 = vmatprep.subr.bf16.mxu0 0
    %1010 = vmatpush2.bf16.msra.mxu0 %v614
    %1011 = vmatprep.subr.bf16.mxu0 0
    %1012 = vmatpush2.bf16.msra.mxu0 %v613
    %1013 = vmatprep.subr.bf16.mxu0 0
    %1014 = vmatpush2.bf16.msra.mxu0 %v612
    %1015 = vmatprep.subr.bf16.mxu0 0
    %1016 = vmatpush2.bf16.msra.mxu0 %v611
    %1017 = vmatprep.mubr.bf16.mxu0 %v940
    %1018 = vmatmul.mubr.bf16.gmra.mxu0 %v939
    %v1019 = vpop.f32.mrf.mxu0
    %v1020 = vadd.f32 %v980, %v1019
    %v1021 = vpop.f32.mrf.mxu0
    %v1022 = vpop.f32.mrf.mxu0
    %v1023 = vpop.f32.mrf.mxu0
    %1024 = vdwg.mxu0
    %1025 = vmatprep.subr.bf16.mxu0 0
    %1026 = vmatpush1.bf16.msra.mxu0 %v626
    %1027 = vmatprep.subr.bf16.mxu0 0
    %1028 = vmatpush1.bf16.msra.mxu0 %v625
    %1029 = vmatprep.subr.bf16.mxu0 0
    %1030 = vmatpush1.bf16.msra.mxu0 %v624
    %1031 = vmatprep.subr.bf16.mxu0 0
    %1032 = vmatpush1.bf16.msra.mxu0 %v623
    %1033 = vmatprep.subr.bf16.mxu0 0
    %1034 = vmatpush1.bf16.msra.mxu0 %v622
    %1035 = vmatprep.subr.bf16.mxu0 0
    %1036 = vmatpush1.bf16.msra.mxu0 %v621
    %1037 = vmatprep.subr.bf16.mxu0 0
    %1038 = vmatpush1.bf16.msra.mxu0 %v620
    %1039 = vmatprep.subr.bf16.mxu0 0
    %1040 = vmatpush1.bf16.msra.mxu0 %v619
    %1041 = vmatprep.subr.bf16.mxu0 0
    %1042 = vmatpush2.bf16.msra.mxu0 %v634
    %1043 = vmatprep.subr.bf16.mxu0 0
    %1044 = vmatpush2.bf16.msra.mxu0 %v633
    %1045 = vmatprep.subr.bf16.mxu0 0
    %1046 = vmatpush2.bf16.msra.mxu0 %v632
    %1047 = vmatprep.subr.bf16.mxu0 0
    %1048 = vmatpush2.bf16.msra.mxu0 %v631
    %1049 = vmatprep.subr.bf16.mxu0 0
    %1050 = vmatpush2.bf16.msra.mxu0 %v630
    %1051 = vmatprep.subr.bf16.mxu0 0
    %1052 = vmatpush2.bf16.msra.mxu0 %v629
    %1053 = vmatprep.subr.bf16.mxu0 0
    %1054 = vmatpush2.bf16.msra.mxu0 %v628
    %1055 = vmatprep.subr.bf16.mxu0 0
    %1056 = vmatpush2.bf16.msra.mxu0 %v627
    %1057 = vmatprep.mubr.bf16.mxu0 %v942
    %1058 = vmatmul.mubr.bf16.gmra.mxu0 %v941
    %v1059 = vpop.f32.mrf.mxu0
    %v1060 = vadd.f32 %v1020, %v1059
    %v1061 = vpop.f32.mrf.mxu0
    %v1062 = vpop.f32.mrf.mxu0
    %v1063 = vpop.f32.mrf.mxu0
    %1064 = vdwg.mxu0
    %1065 = vmatprep.subr.bf16.mxu0 0
    %1066 = vmatpush1.bf16.msra.mxu0 %v642
    %1067 = vmatprep.subr.bf16.mxu0 0
    %1068 = vmatpush1.bf16.msra.mxu0 %v641
    %1069 = vmatprep.subr.bf16.mxu0 0
    %1070 = vmatpush1.bf16.msra.mxu0 %v640
    %1071 = vmatprep.subr.bf16.mxu0 0
    %1072 = vmatpush1.bf16.msra.mxu0 %v639
    %1073 = vmatprep.subr.bf16.mxu0 0
    %1074 = vmatpush1.bf16.msra.mxu0 %v638
    %1075 = vmatprep.subr.bf16.mxu0 0
    %1076 = vmatpush1.bf16.msra.mxu0 %v637
    %1077 = vmatprep.subr.bf16.mxu0 0
    %1078 = vmatpush1.bf16.msra.mxu0 %v636
    %1079 = vmatprep.subr.bf16.mxu0 0
    %1080 = vmatpush1.bf16.msra.mxu0 %v635
    %1081 = vmatprep.subr.bf16.mxu0 0
    %1082 = vmatpush2.bf16.msra.mxu0 %v650
    %1083 = vmatprep.subr.bf16.mxu0 0
    %1084 = vmatpush2.bf16.msra.mxu0 %v649
    %1085 = vmatprep.subr.bf16.mxu0 0
    %1086 = vmatpush2.bf16.msra.mxu0 %v648
    %1087 = vmatprep.subr.bf16.mxu0 0
    %1088 = vmatpush2.bf16.msra.mxu0 %v647
    %1089 = vmatprep.subr.bf16.mxu0 0
    %1090 = vmatpush2.bf16.msra.mxu0 %v646
    %1091 = vmatprep.subr.bf16.mxu0 0
    %1092 = vmatpush2.bf16.msra.mxu0 %v645
    %1093 = vmatprep.subr.bf16.mxu0 0
    %1094 = vmatpush2.bf16.msra.mxu0 %v644
    %1095 = vmatprep.subr.bf16.mxu0 0
    %1096 = vmatpush2.bf16.msra.mxu0 %v643
    %1097 = vmatprep.mubr.bf16.mxu0 %v944
    %1098 = vmatmul.mubr.bf16.gmra.mxu0 %v943
    %v1099 = vpop.f32.mrf.mxu0
    %v1100 = vadd.f32 %v1060, %v1099
    %v1101 = vpop.f32.mrf.mxu0
    %v1102 = vpop.f32.mrf.mxu0
    %v1103 = vpop.f32.mrf.mxu0
    %1104 = vdwg.mxu0
    %v1105 = vadd.f32 %v870, %v1100
    %1106 = vmax.xlane.f32.xlu0 %v1105
    %v1107 = vpop.xlane.xlu0 %1106
    %v1108 = vsub.f32 %v1105, %v1107
    %v1109 = vmul.f32 %v1108, 1.442695
    %v1110 = vpow.pop %v1109
    %1111 = vadd.xlane.f32.xlu0 %v1110
    %v1112 = vpop.xlane.xlu0 %1111
    %v1113 = vrcp.pop %v1112
    %v1114 = vmul.f32 %v1110, %v1113
    %v1115 = vsub.f32 %v1114, %v99
    %v1116 = vpack.c.bf16 %v1115, %v1115
    %v1181 = vunpack.c.l.b16 %v228
    %v1182 = vunpack.c.h.b16 %v228
    %v1183 = vunpack.c.l.b16 %v229
    %v1184 = vunpack.c.h.b16 %v229
    %v1185 = vunpack.c.l.b16 %v230
    %v1186 = vunpack.c.h.b16 %v230
    %v1187 = vunpack.c.l.b16 %v231
    %v1188 = vunpack.c.h.b16 %v231
    %v1189 = vunpack.c.l.b16 %v232
    %v1190 = vunpack.c.h.b16 %v232
    %v1191 = vunpack.c.l.b16 %v233
    %v1192 = vunpack.c.h.b16 %v233
    %v1193 = vunpack.c.l.b16 %v234
    %v1194 = vunpack.c.h.b16 %v234
    %v1195 = vunpack.c.l.b16 %v235
    %v1196 = vunpack.c.h.b16 %v235
    %v1197 = vunpack.c.l.b16 %v236
    %v1198 = vunpack.c.h.b16 %v236
    %v1199 = vunpack.c.l.b16 %v237
    %v1200 = vunpack.c.h.b16 %v237
    %v1201 = vunpack.c.l.b16 %v238
    %v1202 = vunpack.c.h.b16 %v238
    %v1203 = vunpack.c.l.b16 %v239
    %v1204 = vunpack.c.h.b16 %v239
    %v1205 = vunpack.c.l.b16 %v240
    %v1206 = vunpack.c.h.b16 %v240
    %v1207 = vunpack.c.l.b16 %v241
    %v1208 = vunpack.c.h.b16 %v241
    %v1209 = vunpack.c.l.b16 %v242
    %v1210 = vunpack.c.h.b16 %v242
    %v1211 = vunpack.c.l.b16 %v243
    %v1212 = vunpack.c.h.b16 %v243
    %v1213 = vunpack.c.l.b16 %v244
    %v1214 = vunpack.c.h.b16 %v244
    %v1215 = vunpack.c.l.b16 %v245
    %v1216 = vunpack.c.h.b16 %v245
    %v1217 = vunpack.c.l.b16 %v246
    %v1218 = vunpack.c.h.b16 %v246
    %v1219 = vunpack.c.l.b16 %v247
    %v1220 = vunpack.c.h.b16 %v247
    %v1221 = vunpack.c.l.b16 %v248
    %v1222 = vunpack.c.h.b16 %v248
    %v1223 = vunpack.c.l.b16 %v249
    %v1224 = vunpack.c.h.b16 %v249
    %v1225 = vunpack.c.l.b16 %v250
    %v1226 = vunpack.c.h.b16 %v250
    %v1227 = vunpack.c.l.b16 %v251
    %v1228 = vunpack.c.h.b16 %v251
    %v1229 = vunpack.c.l.b16 %v252
    %v1230 = vunpack.c.h.b16 %v252
    %v1231 = vunpack.c.l.b16 %v253
    %v1232 = vunpack.c.h.b16 %v253
    %v1233 = vunpack.c.l.b16 %v254
    %v1234 = vunpack.c.h.b16 %v254
    %v1235 = vunpack.c.l.b16 %v255
    %v1236 = vunpack.c.h.b16 %v255
    %v1237 = vunpack.c.l.b16 %v256
    %v1238 = vunpack.c.h.b16 %v256
    %v1239 = vunpack.c.l.b16 %v257
    %v1240 = vunpack.c.h.b16 %v257
    %v1241 = vunpack.c.l.b16 %v258
    %v1242 = vunpack.c.h.b16 %v258
    %v1243 = vunpack.c.l.b16 %v259
    %v1244 = vunpack.c.h.b16 %v259
    %v1245 = vunpack.c.l.b16 %v260
    %v1246 = vunpack.c.h.b16 %v260
    %v1247 = vunpack.c.l.b16 %v261
    %v1248 = vunpack.c.h.b16 %v261
    %v1249 = vunpack.c.l.b16 %v262
    %v1250 = vunpack.c.h.b16 %v262
    %v1251 = vunpack.c.l.b16 %v263
    %v1252 = vunpack.c.h.b16 %v263
    %v1253 = vunpack.c.l.b16 %v264
    %v1254 = vunpack.c.h.b16 %v264
    %v1255 = vunpack.c.l.b16 %v265
    %v1256 = vunpack.c.h.b16 %v265
    %v1257 = vunpack.c.l.b16 %v266
    %v1258 = vunpack.c.h.b16 %v266
    %v1259 = vunpack.c.l.b16 %v267
    %v1260 = vunpack.c.h.b16 %v267
    %v1261 = vunpack.c.l.b16 %v268
    %v1262 = vunpack.c.h.b16 %v268
    %v1263 = vunpack.c.l.b16 %v269
    %v1264 = vunpack.c.h.b16 %v269
    %v1265 = vunpack.c.l.b16 %v270
    %v1266 = vunpack.c.h.b16 %v270
    %v1267 = vunpack.c.l.b16 %v271
    %v1268 = vunpack.c.h.b16 %v271
    %v1269 = vunpack.c.l.b16 %v272
    %v1270 = vunpack.c.h.b16 %v272
    %v1271 = vunpack.c.l.b16 %v273
    %v1272 = vunpack.c.h.b16 %v273
    %v1273 = vunpack.c.l.b16 %v274
    %v1274 = vunpack.c.h.b16 %v274
    %v1275 = vunpack.c.l.b16 %v275
    %v1276 = vunpack.c.h.b16 %v275
    %v1277 = vunpack.c.l.b16 %v276
    %v1278 = vunpack.c.h.b16 %v276
    %v1279 = vunpack.c.l.b16 %v277
    %v1280 = vunpack.c.h.b16 %v277
    %v1281 = vunpack.c.l.b16 %v278
    %v1282 = vunpack.c.h.b16 %v278
    %v1283 = vunpack.c.l.b16 %v279
    %v1284 = vunpack.c.h.b16 %v279
    %v1285 = vunpack.c.l.b16 %v280
    %v1286 = vunpack.c.h.b16 %v280
    %v1287 = vunpack.c.l.b16 %v281
    %v1288 = vunpack.c.h.b16 %v281
    %v1289 = vunpack.c.l.b16 %v282
    %v1290 = vunpack.c.h.b16 %v282
    %v1291 = vunpack.c.l.b16 %v283
    %v1292 = vunpack.c.h.b16 %v283
    %v1293 = vunpack.c.l.b16 %v284
    %v1294 = vunpack.c.h.b16 %v284
    %v1295 = vunpack.c.l.b16 %v285
    %v1296 = vunpack.c.h.b16 %v285
    %v1297 = vunpack.c.l.b16 %v286
    %v1298 = vunpack.c.h.b16 %v286
    %v1299 = vunpack.c.l.b16 %v287
    %v1300 = vunpack.c.h.b16 %v287
    %v1301 = vunpack.c.l.b16 %v288
    %v1302 = vunpack.c.h.b16 %v288
    %v1303 = vunpack.c.l.b16 %v289
    %v1304 = vunpack.c.h.b16 %v289
    %v1305 = vunpack.c.l.b16 %v290
    %v1306 = vunpack.c.h.b16 %v290
    %v1307 = vunpack.c.l.b16 %v291
    %v1308 = vunpack.c.h.b16 %v291
    %v1309 = vpack.c.b16 %v1189, %v1181
    %v1310 = vpack.c.b16 %v1190, %v1182
    %v1311 = vpack.c.b16 %v1191, %v1183
    %v1312 = vpack.c.b16 %v1192, %v1184
    %v1313 = vpack.c.b16 %v1193, %v1185
    %v1314 = vpack.c.b16 %v1194, %v1186
    %v1315 = vpack.c.b16 %v1195, %v1187
    %v1316 = vpack.c.b16 %v1196, %v1188
    %v1317 = vpack.c.b16 %v1205, %v1197
    %v1318 = vpack.c.b16 %v1206, %v1198
    %v1319 = vpack.c.b16 %v1207, %v1199
    %v1320 = vpack.c.b16 %v1208, %v1200
    %v1321 = vpack.c.b16 %v1209, %v1201
    %v1322 = vpack.c.b16 %v1210, %v1202
    %v1323 = vpack.c.b16 %v1211, %v1203
    %v1324 = vpack.c.b16 %v1212, %v1204
    %v1325 = vpack.c.b16 %v1221, %v1213
    %v1326 = vpack.c.b16 %v1222, %v1214
    %v1327 = vpack.c.b16 %v1223, %v1215
    %v1328 = vpack.c.b16 %v1224, %v1216
    %v1329 = vpack.c.b16 %v1225, %v1217
    %v1330 = vpack.c.b16 %v1226, %v1218
    %v1331 = vpack.c.b16 %v1227, %v1219
    %v1332 = vpack.c.b16 %v1228, %v1220
    %v1333 = vpack.c.b16 %v1237, %v1229
    %v1334 = vpack.c.b16 %v1238, %v1230
    %v1335 = vpack.c.b16 %v1239, %v1231
    %v1336 = vpack.c.b16 %v1240, %v1232
    %v1337 = vpack.c.b16 %v1241, %v1233
    %v1338 = vpack.c.b16 %v1242, %v1234
    %v1339 = vpack.c.b16 %v1243, %v1235
    %v1340 = vpack.c.b16 %v1244, %v1236
    %v1341 = vpack.c.b16 %v1253, %v1245
    %v1342 = vpack.c.b16 %v1254, %v1246
    %v1343 = vpack.c.b16 %v1255, %v1247
    %v1344 = vpack.c.b16 %v1256, %v1248
    %v1345 = vpack.c.b16 %v1257, %v1249
    %v1346 = vpack.c.b16 %v1258, %v1250
    %v1347 = vpack.c.b16 %v1259, %v1251
    %v1348 = vpack.c.b16 %v1260, %v1252
    %v1349 = vpack.c.b16 %v1269, %v1261
    %v1350 = vpack.c.b16 %v1270, %v1262
    %v1351 = vpack.c.b16 %v1271, %v1263
    %v1352 = vpack.c.b16 %v1272, %v1264
    %v1353 = vpack.c.b16 %v1273, %v1265
    %v1354 = vpack.c.b16 %v1274, %v1266
    %v1355 = vpack.c.b16 %v1275, %v1267
    %v1356 = vpack.c.b16 %v1276, %v1268
    %v1357 = vpack.c.b16 %v1285, %v1277
    %v1358 = vpack.c.b16 %v1286, %v1278
    %v1359 = vpack.c.b16 %v1287, %v1279
    %v1360 = vpack.c.b16 %v1288, %v1280
    %v1361 = vpack.c.b16 %v1289, %v1281
    %v1362 = vpack.c.b16 %v1290, %v1282
    %v1363 = vpack.c.b16 %v1291, %v1283
    %v1364 = vpack.c.b16 %v1292, %v1284
    %v1365 = vpack.c.b16 %v1301, %v1293
    %v1366 = vpack.c.b16 %v1302, %v1294
    %v1367 = vpack.c.b16 %v1303, %v1295
    %v1368 = vpack.c.b16 %v1304, %v1296
    %v1369 = vpack.c.b16 %v1305, %v1297
    %v1370 = vpack.c.b16 %v1306, %v1298
    %v1371 = vpack.c.b16 %v1307, %v1299
    %v1372 = vpack.c.b16 %v1308, %v1300
    %1437 = vmatprep.subr.bf16.mxu0 %v1366
    %1438 = vmatpush1.bf16.msra.mxu0 %v1365
    %1439 = vmatprep.subr.bf16.mxu0 %v1358
    %1440 = vmatpush1.bf16.msra.mxu0 %v1357
    %1441 = vmatprep.subr.bf16.mxu0 %v1350
    %1442 = vmatpush1.bf16.msra.mxu0 %v1349
    %1443 = vmatprep.subr.bf16.mxu0 %v1342
    %1444 = vmatpush1.bf16.msra.mxu0 %v1341
    %1445 = vmatprep.subr.bf16.mxu0 %v1334
    %1446 = vmatpush1.bf16.msra.mxu0 %v1333
    %1447 = vmatprep.subr.bf16.mxu0 %v1326
    %1448 = vmatpush1.bf16.msra.mxu0 %v1325
    %1449 = vmatprep.subr.bf16.mxu0 %v1318
    %1450 = vmatpush1.bf16.msra.mxu0 %v1317
    %1451 = vmatprep.subr.bf16.mxu0 %v1310
    %1452 = vmatpush1.bf16.msra.mxu0 %v1309
    %1453 = vmatprep.subr.bf16.mxu0 0
    %1454 = vmatpush2.bf16.msra.mxu0 0
    %1455 = vmatprep.subr.bf16.mxu0 0
    %1456 = vmatpush2.bf16.msra.mxu0 0
    %1457 = vmatprep.subr.bf16.mxu0 0
    %1458 = vmatpush2.bf16.msra.mxu0 0
    %1459 = vmatprep.subr.bf16.mxu0 0
    %1460 = vmatpush2.bf16.msra.mxu0 0
    %1461 = vmatprep.subr.bf16.mxu0 0
    %1462 = vmatpush2.bf16.msra.mxu0 0
    %1463 = vmatprep.subr.bf16.mxu0 0
    %1464 = vmatpush2.bf16.msra.mxu0 0
    %1465 = vmatprep.subr.bf16.mxu0 0
    %1466 = vmatpush2.bf16.msra.mxu0 0
    %1467 = vmatprep.subr.bf16.mxu0 0
    %1468 = vmatpush2.bf16.msra.mxu0 0
    %1469 = vmatprep.mubr.bf16.mxu0 0
    %1470 = vmatmul.mubr.bf16.gmra.mxu0 %v1116
    %v1471 = vpop.f32.mrf.mxu0
    %v1472 = vadd.f32 0.0, %v1471
    %v1473 = vpop.f32.mrf.mxu0
    %v1474 = vadd.f32 0.0, %v1473
    %v1475 = vpop.f32.mrf.mxu0
    %v1476 = vpop.f32.mrf.mxu0
    %1477 = vdwg.mxu0
    %1478 = vmatprep.subr.bf16.mxu0 %v1368
    %1479 = vmatpush1.bf16.msra.mxu0 %v1367
    %1480 = vmatprep.subr.bf16.mxu0 %v1360
    %1481 = vmatpush1.bf16.msra.mxu0 %v1359
    %1482 = vmatprep.subr.bf16.mxu0 %v1352
    %1483 = vmatpush1.bf16.msra.mxu0 %v1351
    %1484 = vmatprep.subr.bf16.mxu0 %v1344
    %1485 = vmatpush1.bf16.msra.mxu0 %v1343
    %1486 = vmatprep.subr.bf16.mxu0 %v1336
    %1487 = vmatpush1.bf16.msra.mxu0 %v1335
    %1488 = vmatprep.subr.bf16.mxu0 %v1328
    %1489 = vmatpush1.bf16.msra.mxu0 %v1327
    %1490 = vmatprep.subr.bf16.mxu0 %v1320
    %1491 = vmatpush1.bf16.msra.mxu0 %v1319
    %1492 = vmatprep.subr.bf16.mxu0 %v1312
    %1493 = vmatpush1.bf16.msra.mxu0 %v1311
    %1494 = vmatprep.subr.bf16.mxu0 0
    %1495 = vmatpush2.bf16.msra.mxu0 0
    %1496 = vmatprep.subr.bf16.mxu0 0
    %1497 = vmatpush2.bf16.msra.mxu0 0
    %1498 = vmatprep.subr.bf16.mxu0 0
    %1499 = vmatpush2.bf16.msra.mxu0 0
    %1500 = vmatprep.subr.bf16.mxu0 0
    %1501 = vmatpush2.bf16.msra.mxu0 0
    %1502 = vmatprep.subr.bf16.mxu0 0
    %1503 = vmatpush2.bf16.msra.mxu0 0
    %1504 = vmatprep.subr.bf16.mxu0 0
    %1505 = vmatpush2.bf16.msra.mxu0 0
    %1506 = vmatprep.subr.bf16.mxu0 0
    %1507 = vmatpush2.bf16.msra.mxu0 0
    %1508 = vmatprep.subr.bf16.mxu0 0
    %1509 = vmatpush2.bf16.msra.mxu0 0
    %1510 = vmatprep.mubr.bf16.mxu0 0
    %1511 = vmatmul.mubr.bf16.gmra.mxu0 %v1116
    %v1512 = vpop.f32.mrf.mxu0
    %v1513 = vadd.f32 0.0, %v1512
    %v1514 = vpop.f32.mrf.mxu0
    %v1515 = vadd.f32 0.0, %v1514
    %v1516 = vpop.f32.mrf.mxu0
    %v1517 = vpop.f32.mrf.mxu0
    %1518 = vdwg.mxu0
    %1519 = vmatprep.subr.bf16.mxu0 %v1370
    %1520 = vmatpush1.bf16.msra.mxu0 %v1369
    %1521 = vmatprep.subr.bf16.mxu0 %v1362
    %1522 = vmatpush1.bf16.msra.mxu0 %v1361
    %1523 = vmatprep.subr.bf16.mxu0 %v1354
    %1524 = vmatpush1.bf16.msra.mxu0 %v1353
    %1525 = vmatprep.subr.bf16.mxu0 %v1346
    %1526 = vmatpush1.bf16.msra.mxu0 %v1345
    %1527 = vmatprep.subr.bf16.mxu0 %v1338
    %1528 = vmatpush1.bf16.msra.mxu0 %v1337
    %1529 = vmatprep.subr.bf16.mxu0 %v1330
    %1530 = vmatpush1.bf16.msra.mxu0 %v1329
    %1531 = vmatprep.subr.bf16.mxu0 %v1322
    %1532 = vmatpush1.bf16.msra.mxu0 %v1321
    %1533 = vmatprep.subr.bf16.mxu0 %v1314
    %1534 = vmatpush1.bf16.msra.mxu0 %v1313
    %1535 = vmatprep.subr.bf16.mxu0 0
    %1536 = vmatpush2.bf16.msra.mxu0 0
    %1537 = vmatprep.subr.bf16.mxu0 0
    %1538 = vmatpush2.bf16.msra.mxu0 0
    %1539 = vmatprep.subr.bf16.mxu0 0
    %1540 = vmatpush2.bf16.msra.mxu0 0
    %1541 = vmatprep.subr.bf16.mxu0 0
    %1542 = vmatpush2.bf16.msra.mxu0 0
    %1543 = vmatprep.subr.bf16.mxu0 0
    %1544 = vmatpush2.bf16.msra.mxu0 0
    %1545 = vmatprep.subr.bf16.mxu0 0
    %1546 = vmatpush2.bf16.msra.mxu0 0
    %1547 = vmatprep.subr.bf16.mxu0 0
    %1548 = vmatpush2.bf16.msra.mxu0 0
    %1549 = vmatprep.subr.bf16.mxu0 0
    %1550 = vmatpush2.bf16.msra.mxu0 0
    %1551 = vmatprep.mubr.bf16.mxu0 0
    %1552 = vmatmul.mubr.bf16.gmra.mxu0 %v1116
    %v1553 = vpop.f32.mrf.mxu0
    %v1554 = vadd.f32 0.0, %v1553
    %v1555 = vpop.f32.mrf.mxu0
    %v1556 = vadd.f32 0.0, %v1555
    %v1557 = vpop.f32.mrf.mxu0
    %v1558 = vpop.f32.mrf.mxu0
    %1559 = vdwg.mxu0
    %1560 = vmatprep.subr.bf16.mxu0 %v1372
    %1561 = vmatpush1.bf16.msra.mxu0 %v1371
    %1562 = vmatprep.subr.bf16.mxu0 %v1364
    %1563 = vmatpush1.bf16.msra.mxu0 %v1363
    %1564 = vmatprep.subr.bf16.mxu0 %v1356
    %1565 = vmatpush1.bf16.msra.mxu0 %v1355
    %1566 = vmatprep.subr.bf16.mxu0 %v1348
    %1567 = vmatpush1.bf16.msra.mxu0 %v1347
    %1568 = vmatprep.subr.bf16.mxu0 %v1340
    %1569 = vmatpush1.bf16.msra.mxu0 %v1339
    %1570 = vmatprep.subr.bf16.mxu0 %v1332
    %1571 = vmatpush1.bf16.msra.mxu0 %v1331
    %1572 = vmatprep.subr.bf16.mxu0 %v1324
    %1573 = vmatpush1.bf16.msra.mxu0 %v1323
    %1574 = vmatprep.subr.bf16.mxu0 %v1316
    %1575 = vmatpush1.bf16.msra.mxu0 %v1315
    %1576 = vmatprep.subr.bf16.mxu0 0
    %1577 = vmatpush2.bf16.msra.mxu0 0
    %1578 = vmatprep.subr.bf16.mxu0 0
    %1579 = vmatpush2.bf16.msra.mxu0 0
    %1580 = vmatprep.subr.bf16.mxu0 0
    %1581 = vmatpush2.bf16.msra.mxu0 0
    %1582 = vmatprep.subr.bf16.mxu0 0
    %1583 = vmatpush2.bf16.msra.mxu0 0
    %1584 = vmatprep.subr.bf16.mxu0 0
    %1585 = vmatpush2.bf16.msra.mxu0 0
    %1586 = vmatprep.subr.bf16.mxu0 0
    %1587 = vmatpush2.bf16.msra.mxu0 0
    %1588 = vmatprep.subr.bf16.mxu0 0
    %1589 = vmatpush2.bf16.msra.mxu0 0
    %1590 = vmatprep.subr.bf16.mxu0 0
    %1591 = vmatpush2.bf16.msra.mxu0 0
    %1592 = vmatprep.mubr.bf16.mxu0 0
    %1593 = vmatmul.mubr.bf16.gmra.mxu0 %v1116
    %v1594 = vpop.f32.mrf.mxu0
    %v1595 = vadd.f32 0.0, %v1594
    %v1596 = vpop.f32.mrf.mxu0
    %v1597 = vadd.f32 0.0, %v1596
    %v1598 = vpop.f32.mrf.mxu0
    %v1599 = vpop.f32.mrf.mxu0
    %1600 = vdwg.mxu0
    %v1601 = vmax.f32 %v1472, %v1554
    %v1602 = vmax.f32 %v1474, %v1556
    %v1603 = vmax.f32 %v1513, %v1595
    %v1604 = vmax.f32 %v1515, %v1597
    %v1605 = vmax.f32 %v1601, %v1602
    %v1606 = vmax.f32 %v1603, %v1604
    %v1607 = vmax.f32 %v1605, %v1606
    %1608 = vmax.xlane.f32.xlu0 %v1607
    %v1609 = vpop.xlane.xlu0 %1608
    %v1610 = vadd.f32 %v1609, 1e-12
    %v1611 = vrcp.pop %v1610
    %v1612 = vmul.f32 %v1472, %v1611
    %v1613 = vmul.f32 %v1474, %v1611
    %v1614 = vmul.f32 %v1513, %v1611
    %v1615 = vmul.f32 %v1515, %v1611
    %v1616 = vmul.f32 %v1554, %v1611
    %v1617 = vmul.f32 %v1556, %v1611
    %v1618 = vmul.f32 %v1595, %v1611
    %v1619 = vmul.f32 %v1597, %v1611
    %v1620 = vmul.f32 %v1612, %v1612
    %v1621 = vmul.f32 %v1613, %v1613
    %v1622 = vmul.f32 %v1614, %v1614
    %v1623 = vmul.f32 %v1615, %v1615
    %v1624 = vmul.f32 %v1616, %v1616
    %v1625 = vmul.f32 %v1617, %v1617
    %v1626 = vmul.f32 %v1618, %v1618
    %v1627 = vmul.f32 %v1619, %v1619
    %v1628 = vadd.f32 %v1620, %v1621
    %v1629 = vadd.f32 %v1628, %v1622
    %v1630 = vadd.f32 %v1629, %v1623
    %v1631 = vadd.f32 %v1630, %v1624
    %v1632 = vadd.f32 %v1631, %v1625
    %v1633 = vadd.f32 %v1632, %v1626
    %v1634 = vadd.f32 %v1633, %v1627
    %1635 = vadd.xlane.f32.xlu0 %v1634
    %v1636 = vpop.xlane.xlu0 %1635
    %v1637 = vrsqrt.pop %v1636
    %v1638 = vmul.f32 %v1636, %v1637
    %vm1639 = vcmp.eq.f32.partialorder %v1636, inf
    %v1640 = vsel %vm1639, %v1636, %v1638
    %vm1641 = vcmp.eq.f32.partialorder %v1636, 0.0
    %v1642 = vand.u32 %v1636, 2147483648
    %v1643 = vsel %vm1641, %v1642, %v1640
    %v1644 = vadd.f32 %v1643, 1e-06
    %v1645 = vrcp.pop %v1644
    %v1646 = vmul.f32 1.0, %v1645
    %v1647 = vmul.f32 %v1612, %v1646
    %v1648 = vmul.f32 %v1613, %v1646
    %v1649 = vmul.f32 %v1614, %v1646
    %v1650 = vmul.f32 %v1615, %v1646
    %v1651 = vmul.f32 %v1616, %v1646
    %v1652 = vmul.f32 %v1617, %v1646
    %v1653 = vmul.f32 %v1618, %v1646
    %v1654 = vmul.f32 %v1619, %v1646
    %v1655 = vpack.c.bf16 %v1647, %v1647
    %v1656 = vpack.c.bf16 %v1648, %v1648
    %v1657 = vpack.c.bf16 %v1649, %v1649
    %v1658 = vpack.c.bf16 %v1650, %v1650
    %v1659 = vpack.c.bf16 %v1651, %v1651
    %v1660 = vpack.c.bf16 %v1652, %v1652
    %v1661 = vpack.c.bf16 %v1653, %v1653
    %v1662 = vpack.c.bf16 %v1654, %v1654
    %1663 = vmatprep.subr.bf16.mxu0 0
    %1664 = vmatpush1.bf16.msra.mxu0 %v594
    %1665 = vmatprep.subr.bf16.mxu0 0
    %1666 = vmatpush1.bf16.msra.mxu0 %v593
    %1667 = vmatprep.subr.bf16.mxu0 0
    %1668 = vmatpush1.bf16.msra.mxu0 %v592
    %1669 = vmatprep.subr.bf16.mxu0 0
    %1670 = vmatpush1.bf16.msra.mxu0 %v591
    %1671 = vmatprep.subr.bf16.mxu0 0
    %1672 = vmatpush1.bf16.msra.mxu0 %v590
    %1673 = vmatprep.subr.bf16.mxu0 0
    %1674 = vmatpush1.bf16.msra.mxu0 %v589
    %1675 = vmatprep.subr.bf16.mxu0 0
    %1676 = vmatpush1.bf16.msra.mxu0 %v588
    %1677 = vmatprep.subr.bf16.mxu0 0
    %1678 = vmatpush1.bf16.msra.mxu0 %v587
    %1679 = vmatprep.subr.bf16.mxu0 0
    %1680 = vmatpush2.bf16.msra.mxu0 %v602
    %1681 = vmatprep.subr.bf16.mxu0 0
    %1682 = vmatpush2.bf16.msra.mxu0 %v601
    %1683 = vmatprep.subr.bf16.mxu0 0
    %1684 = vmatpush2.bf16.msra.mxu0 %v600
    %1685 = vmatprep.subr.bf16.mxu0 0
    %1686 = vmatpush2.bf16.msra.mxu0 %v599
    %1687 = vmatprep.subr.bf16.mxu0 0
    %1688 = vmatpush2.bf16.msra.mxu0 %v598
    %1689 = vmatprep.subr.bf16.mxu0 0
    %1690 = vmatpush2.bf16.msra.mxu0 %v597
    %1691 = vmatprep.subr.bf16.mxu0 0
    %1692 = vmatpush2.bf16.msra.mxu0 %v596
    %1693 = vmatprep.subr.bf16.mxu0 0
    %1694 = vmatpush2.bf16.msra.mxu0 %v595
    %1695 = vmatprep.mubr.bf16.mxu0 %v1656
    %1696 = vmatmul.mubr.bf16.gmra.mxu0 %v1655
    %v1697 = vpop.f32.mrf.mxu0
    %v1698 = vadd.f32 0.0, %v1697
    %v1699 = vpop.f32.mrf.mxu0
    %v1700 = vpop.f32.mrf.mxu0
    %v1701 = vpop.f32.mrf.mxu0
    %1702 = vdwg.mxu0
    %1703 = vmatprep.subr.bf16.mxu0 0
    %1704 = vmatpush1.bf16.msra.mxu0 %v610
    %1705 = vmatprep.subr.bf16.mxu0 0
    %1706 = vmatpush1.bf16.msra.mxu0 %v609
    %1707 = vmatprep.subr.bf16.mxu0 0
    %1708 = vmatpush1.bf16.msra.mxu0 %v608
    %1709 = vmatprep.subr.bf16.mxu0 0
    %1710 = vmatpush1.bf16.msra.mxu0 %v607
    %1711 = vmatprep.subr.bf16.mxu0 0
    %1712 = vmatpush1.bf16.msra.mxu0 %v606
    %1713 = vmatprep.subr.bf16.mxu0 0
    %1714 = vmatpush1.bf16.msra.mxu0 %v605
    %1715 = vmatprep.subr.bf16.mxu0 0
    %1716 = vmatpush1.bf16.msra.mxu0 %v604
    %1717 = vmatprep.subr.bf16.mxu0 0
    %1718 = vmatpush1.bf16.msra.mxu0 %v603
    %1719 = vmatprep.subr.bf16.mxu0 0
    %1720 = vmatpush2.bf16.msra.mxu0 %v618
    %1721 = vmatprep.subr.bf16.mxu0 0
    %1722 = vmatpush2.bf16.msra.mxu0 %v617
    %1723 = vmatprep.subr.bf16.mxu0 0
    %1724 = vmatpush2.bf16.msra.mxu0 %v616
    %1725 = vmatprep.subr.bf16.mxu0 0
    %1726 = vmatpush2.bf16.msra.mxu0 %v615
    %1727 = vmatprep.subr.bf16.mxu0 0
    %1728 = vmatpush2.bf16.msra.mxu0 %v614
    %1729 = vmatprep.subr.bf16.mxu0 0
    %1730 = vmatpush2.bf16.msra.mxu0 %v613
    %1731 = vmatprep.subr.bf16.mxu0 0
    %1732 = vmatpush2.bf16.msra.mxu0 %v612
    %1733 = vmatprep.subr.bf16.mxu0 0
    %1734 = vmatpush2.bf16.msra.mxu0 %v611
    %1735 = vmatprep.mubr.bf16.mxu0 %v1658
    %1736 = vmatmul.mubr.bf16.gmra.mxu0 %v1657
    %v1737 = vpop.f32.mrf.mxu0
    %v1738 = vadd.f32 %v1698, %v1737
    %v1739 = vpop.f32.mrf.mxu0
    %v1740 = vpop.f32.mrf.mxu0
    %v1741 = vpop.f32.mrf.mxu0
    %1742 = vdwg.mxu0
    %1743 = vmatprep.subr.bf16.mxu0 0
    %1744 = vmatpush1.bf16.msra.mxu0 %v626
    %1745 = vmatprep.subr.bf16.mxu0 0
    %1746 = vmatpush1.bf16.msra.mxu0 %v625
    %1747 = vmatprep.subr.bf16.mxu0 0
    %1748 = vmatpush1.bf16.msra.mxu0 %v624
    %1749 = vmatprep.subr.bf16.mxu0 0
    %1750 = vmatpush1.bf16.msra.mxu0 %v623
    %1751 = vmatprep.subr.bf16.mxu0 0
    %1752 = vmatpush1.bf16.msra.mxu0 %v622
    %1753 = vmatprep.subr.bf16.mxu0 0
    %1754 = vmatpush1.bf16.msra.mxu0 %v621
    %1755 = vmatprep.subr.bf16.mxu0 0
    %1756 = vmatpush1.bf16.msra.mxu0 %v620
    %1757 = vmatprep.subr.bf16.mxu0 0
    %1758 = vmatpush1.bf16.msra.mxu0 %v619
    %1759 = vmatprep.subr.bf16.mxu0 0
    %1760 = vmatpush2.bf16.msra.mxu0 %v634
    %1761 = vmatprep.subr.bf16.mxu0 0
    %1762 = vmatpush2.bf16.msra.mxu0 %v633
    %1763 = vmatprep.subr.bf16.mxu0 0
    %1764 = vmatpush2.bf16.msra.mxu0 %v632
    %1765 = vmatprep.subr.bf16.mxu0 0
    %1766 = vmatpush2.bf16.msra.mxu0 %v631
    %1767 = vmatprep.subr.bf16.mxu0 0
    %1768 = vmatpush2.bf16.msra.mxu0 %v630
    %1769 = vmatprep.subr.bf16.mxu0 0
    %1770 = vmatpush2.bf16.msra.mxu0 %v629
    %1771 = vmatprep.subr.bf16.mxu0 0
    %1772 = vmatpush2.bf16.msra.mxu0 %v628
    %1773 = vmatprep.subr.bf16.mxu0 0
    %1774 = vmatpush2.bf16.msra.mxu0 %v627
    %1775 = vmatprep.mubr.bf16.mxu0 %v1660
    %1776 = vmatmul.mubr.bf16.gmra.mxu0 %v1659
    %v1777 = vpop.f32.mrf.mxu0
    %v1778 = vadd.f32 %v1738, %v1777
    %v1779 = vpop.f32.mrf.mxu0
    %v1780 = vpop.f32.mrf.mxu0
    %v1781 = vpop.f32.mrf.mxu0
    %1782 = vdwg.mxu0
    %1783 = vmatprep.subr.bf16.mxu0 0
    %1784 = vmatpush1.bf16.msra.mxu0 %v642
    %1785 = vmatprep.subr.bf16.mxu0 0
    %1786 = vmatpush1.bf16.msra.mxu0 %v641
    %1787 = vmatprep.subr.bf16.mxu0 0
    %1788 = vmatpush1.bf16.msra.mxu0 %v640
    %1789 = vmatprep.subr.bf16.mxu0 0
    %1790 = vmatpush1.bf16.msra.mxu0 %v639
    %1791 = vmatprep.subr.bf16.mxu0 0
    %1792 = vmatpush1.bf16.msra.mxu0 %v638
    %1793 = vmatprep.subr.bf16.mxu0 0
    %1794 = vmatpush1.bf16.msra.mxu0 %v637
    %1795 = vmatprep.subr.bf16.mxu0 0
    %1796 = vmatpush1.bf16.msra.mxu0 %v636
    %1797 = vmatprep.subr.bf16.mxu0 0
    %1798 = vmatpush1.bf16.msra.mxu0 %v635
    %1799 = vmatprep.subr.bf16.mxu0 0
    %1800 = vmatpush2.bf16.msra.mxu0 %v650
    %1801 = vmatprep.subr.bf16.mxu0 0
    %1802 = vmatpush2.bf16.msra.mxu0 %v649
    %1803 = vmatprep.subr.bf16.mxu0 0
    %1804 = vmatpush2.bf16.msra.mxu0 %v648
    %1805 = vmatprep.subr.bf16.mxu0 0
    %1806 = vmatpush2.bf16.msra.mxu0 %v647
    %1807 = vmatprep.subr.bf16.mxu0 0
    %1808 = vmatpush2.bf16.msra.mxu0 %v646
    %1809 = vmatprep.subr.bf16.mxu0 0
    %1810 = vmatpush2.bf16.msra.mxu0 %v645
    %1811 = vmatprep.subr.bf16.mxu0 0
    %1812 = vmatpush2.bf16.msra.mxu0 %v644
    %1813 = vmatprep.subr.bf16.mxu0 0
    %1814 = vmatpush2.bf16.msra.mxu0 %v643
    %1815 = vmatprep.mubr.bf16.mxu0 %v1662
    %1816 = vmatmul.mubr.bf16.gmra.mxu0 %v1661
    %v1817 = vpop.f32.mrf.mxu0
    %v1818 = vadd.f32 %v1778, %v1817
    %v1819 = vpop.f32.mrf.mxu0
    %v1820 = vpop.f32.mrf.mxu0
    %v1821 = vpop.f32.mrf.mxu0
    %1822 = vdwg.mxu0
    %v1823 = vadd.f32 %v870, %v1818
    %1824 = vmax.xlane.f32.xlu0 %v1823
    %v1825 = vpop.xlane.xlu0 %1824
    %v1826 = vsub.f32 %v1823, %v1825
    %v1827 = vmul.f32 %v1826, 1.442695
    %v1828 = vpow.pop %v1827
    %1829 = vadd.xlane.f32.xlu0 %v1828
    %v1830 = vpop.xlane.xlu0 %1829
    %v1831 = vlog2.pop %v1830
    %v1832 = vmul.f32 %v1831, 0.6931472
    %v1833 = vsub.f32 %v1826, %v1832
    %v1834 = vsub.f32 %v97, %v1833
    %v1835 = vmul.f32 %v99, %v1834
    %1836 = vadd.xlane.f32.xlu0 %v1835
    %v1837 = vpop.xlane.xlu0 %1836
    %1838 = vst [vmem:[#allocation11] sm:$0xff] %v1837
    // Predicated region
    $region46: #{tpu_custom_call.1} parent=1 // pred_check
      _
    $region47: #{tpu_custom_call.1} parent=1 // pred_check_branch
      %1840 = sbr.rel (0) target = $region49
    $region48: #{tpu_custom_call.1} parent=1 // pred_region
      %s1842 = ssub.s32 128, 128
      %1843 = vsyncadd [#allocation4], %s1842
      %s1845 = sshll.u32 [#allocation11], 4
      %s1846 = int_to_ptr.vmem [resolvable:$true] %s1845
      %1848 = dma.vmem_to_hbm [thread:$0]  %s1846, 128, %s6, [#allocation4]
    $region49: #{tpu_custom_call.1} parent=1 // pred_fallthru
      _
    // Predicated region
    $region50: #{tpu_custom_call.1} parent=1 // pred_check
      _
    $region51: #{tpu_custom_call.1} parent=1 // pred_check_branch
      %1850 = sbr.rel (0) target = $region53
    $region52: #{tpu_custom_call.1} parent=1 // pred_region
      %1851 = dma.done [#allocation4], 128
    $region53: #{tpu_custom_call.1} parent=1 // pred_fallthru
      _
    %1852 = vsyncpa [#allocation3], 1
    %1853 = vsyncpa [#allocation6], 1
    %1854 = vsyncpa [#allocation9], 1
    %1855 = vsyncpa [#allocation4], 1

</llo_original>
